<compile_context>
chip_gen: v5e
topology: v5e:2x2
jax: 0.10.0
libtpu: 0.0.40
codegen_flags: <defaults>
</compile_context>

<pallas_src>
import functools

import jax
import jax.numpy as jnp
from jax.experimental import pallas as pl
from jax.experimental.pallas import tpu as pltpu


# ---------------------------------------------------------------------------
# Pallas kernel: (optional nearest x2) + conv3x3(same) + bias + activation
#   x_ref: (1, Hp, Wp, Cin)   zero-padded (halo=1) PRE-upsample input tile, bf16
#   w_ref: (9*Cin, Cout)      im2col weights, row = (ky*3+kx)*Cin + ci, BN scale
#                             already folded in, bf16
#   b_ref: (1, Cout)          folded bias, f32
#   o_ref: (1, Ho, Wo, Cout)
# ---------------------------------------------------------------------------
def _conv3x3_kernel(x_ref, w_ref, b_ref, o_ref, *, upsample, act):
    x = x_ref[0]                                   # (Hp, Wp, Cin), bf16
    Hp, Wp, Cin = x.shape
    Cout = w_ref.shape[-1]

    if upsample:
        # nearest x2 of the padded tile, then drop the outer ring:
        #   pad1(up2(x)) == up2(pad1(x))[1:-1, 1:-1]
        xr = jnp.broadcast_to(x[:, None], (Hp, 2, Wp, Cin)).reshape(2 * Hp, Wp, Cin)
        x = jnp.broadcast_to(xr[:, :, None],
                             (2 * Hp, Wp, 2, Cin)).reshape(2 * Hp, 2 * Wp, Cin)
        x = x[1:2 * Hp - 1, 1:2 * Wp - 1, :]

    Hc, Wc, _ = x.shape                            # padded conv-input dims
    Ho, Wo = Hc - 2, Wc - 2

    # im2col slab -> ONE MXU matmul with K = 9*Cin (instead of nine K=Cin dots).
    cols = [x[ky:ky + Ho, kx:kx + Wo, :].reshape(Ho * Wo, Cin)
            for ky in range(3) for kx in range(3)]
    patch = jnp.concatenate(cols, axis=-1)          # (Ho*Wo, 9*Cin), bf16

    acc = jnp.dot(patch, w_ref[...], preferred_element_type=jnp.float32)
    y = acc + b_ref[0]                              # f32 epilogue (no bf16 VPU on v5e)
    if act == "relu":
        y = jnp.maximum(y, 0.0)
    elif act == "sigmoid":
        y = jax.nn.sigmoid(y)
    o_ref[0] = y.reshape(Ho, Wo, Cout).astype(o_ref.dtype)


def conv3x3_fused(x_nhwc, w, b, *, upsample, act, out_dtype):
    """One decoder stage: (optional x2 upsample) + conv3x3 + folded-BN bias + act."""
    N, H, W, Cin = x_nhwc.shape
    Cout = w.shape[-1]
    Hp, Wp = H + 2, W + 2
    Ho, Wo = (2 * H, 2 * W) if upsample else (H, W)

    # halo pad of the SMALL pre-upsample tensor (upsample itself is fused in-kernel)
    xp = jnp.pad(x_nhwc, ((0, 0), (1, 1), (1, 1), (0, 0)))

    kernel = functools.partial(_conv3x3_kernel, upsample=upsample, act=act)

    out_itemsize = jnp.dtype(out_dtype).itemsize
    flops = 2 * N * Ho * Wo * 9 * Cin * Cout
    transcendentals = N * Ho * Wo * Cout if act == "sigmoid" else 0
    bytes_accessed = int(xp.size) * xp.dtype.itemsize \
        + int(w.size) * w.dtype.itemsize + int(b.size) * 4 \
        + N * Ho * Wo * Cout * out_itemsize

    return pl.pallas_call(
        kernel,
        out_shape=jax.ShapeDtypeStruct((N, Ho, Wo, Cout), out_dtype),
        grid=(N,),
        in_specs=[
            pl.BlockSpec((1, Hp, Wp, Cin), lambda n: (n, 0, 0, 0)),
            pl.BlockSpec((9 * Cin, Cout), lambda n: (0, 0)),
            pl.BlockSpec((1, Cout), lambda n: (0, 0)),
        ],
        out_specs=pl.BlockSpec((1, Ho, Wo, Cout), lambda n: (n, 0, 0, 0)),
        compiler_params=pltpu.CompilerParams(dimension_semantics=("parallel",)),
        cost_estimate=pl.CostEstimate(flops=flops,
                                      transcendentals=transcendentals,
                                      bytes_accessed=bytes_accessed),
    )(xp, w, b.reshape(1, Cout))


# ---------------------------------------------------------------------------
# Parameters (deterministic, synthetic). ConvBlock = Conv2d + BN(eval) (+ReLU).
# BN folded into the conv: w <- w * s, bias <- (b - mean)*s + beta, s = gamma/sqrt(var+eps)
# Weight layout for the kernel: (9*Cin, Cout), row index = (ky*3+kx)*Cin + ci, bf16.
# ---------------------------------------------------------------------------
def make_convblock_params(key, cin, cout, eps=1e-5):
    k1, k2, k3, k4, k5, k6 = jax.random.split(key, 6)
    w = 0.1 * jax.random.normal(k1, (cout, cin, 3, 3), jnp.float32)   # OIHW (torch)
    b = 0.1 * jax.random.normal(k2, (cout,), jnp.float32)
    gamma = 1.0 + 0.1 * jax.random.normal(k3, (cout,), jnp.float32)
    beta = 0.1 * jax.random.normal(k4, (cout,), jnp.float32)
    mean = 0.1 * jax.random.normal(k5, (cout,), jnp.float32)
    var = jnp.abs(jax.random.normal(k6, (cout,), jnp.float32)) + 0.5
    s = gamma / jnp.sqrt(var + eps)
    w_im2col = jnp.transpose(w, (2, 3, 1, 0)).reshape(9 * cin, cout) * s[None, :]
    bias = (b - mean) * s + beta
    return w_im2col.astype(jnp.bfloat16), bias.astype(jnp.float32)


def make_plain_conv_params(key, cin, cout):
    k1, k2 = jax.random.split(key, 2)
    w = 0.1 * jax.random.normal(k1, (cout, cin, 3, 3), jnp.float32)
    b = 0.1 * jax.random.normal(k2, (cout,), jnp.float32)
    w_im2col = jnp.transpose(w, (2, 3, 1, 0)).reshape(9 * cin, cout)
    return w_im2col.astype(jnp.bfloat16), b.astype(jnp.float32)


def init_decoder_params(key, latent_channels, channels_list, out_channels):
    keys = jax.random.split(key, len(channels_list) + 1)
    return {
        "stem": make_convblock_params(keys[0], latent_channels, channels_list[0]),
        "upsample": [
            make_convblock_params(keys[i + 1], cin, cout)
            for i, (cin, cout) in enumerate(zip(channels_list[:-1], channels_list[1:]))
        ],
        "to_output": make_plain_conv_params(keys[-1], channels_list[-1], out_channels),
    }


# ---------------------------------------------------------------------------
# Forward pass (matches Decoder.forward). Activations carried as bf16 NHWC.
# ---------------------------------------------------------------------------
def decoder_forward(x_nchw, params):
    x = jnp.transpose(x_nchw, (0, 2, 3, 1)).astype(jnp.bfloat16)     # NCHW -> NHWC
    w, b = params["stem"]
    x = conv3x3_fused(x, w, b, upsample=False, act="relu", out_dtype=jnp.bfloat16)
    for (w, b) in params["upsample"]:
        x = conv3x3_fused(x, w, b, upsample=True, act="relu", out_dtype=jnp.bfloat16)
    w, b = params["to_output"]
    x = conv3x3_fused(x, w, b, upsample=False, act="sigmoid", out_dtype=jnp.float32)
    return jnp.transpose(x, (0, 3, 1, 2))                            # NHWC -> NCHW


# ---------------------------------------------------------------------------
# Pure-JAX reference (f32 math on the same folded/bf16-stored parameters)
# ---------------------------------------------------------------------------
def _ref_conv(x, w, b, act):
    cin = x.shape[-1]
    cout = w.shape[-1]
    w4 = w.astype(jnp.float32).reshape(3, 3, cin, cout)               # HWIO
    y = jax.lax.conv_general_dilated(
        x.astype(jnp.float32), w4, window_strides=(1, 1), padding="SAME",
        dimension_numbers=("NHWC", "HWIO", "NHWC"))
    y = y + b
    if act == "relu":
        y = jnp.maximum(y, 0.0)
    elif act == "sigmoid":
        y = jax.nn.sigmoid(y)
    return y


def decoder_ref(x_nchw, params):
    x = jnp.transpose(x_nchw, (0, 2, 3, 1)).astype(jnp.bfloat16).astype(jnp.float32)
    x = _ref_conv(x, *params["stem"], act="relu")
    for (w, b) in params["upsample"]:
        x = jnp.repeat(jnp.repeat(x, 2, axis=1), 2, axis=2)
        x = _ref_conv(x, w, b, act="relu")
    x = _ref_conv(x, *params["to_output"], act="sigmoid")
    return jnp.transpose(x, (0, 3, 1, 2))


if __name__ == "__main__":
    key = jax.random.PRNGKey(0)
    k_param, k_x = jax.random.split(key)

    latent_channels = 4
    channels_list = [32, 16]
    out_channels = 3
    N, H, W = 2, 16, 16

    params = init_decoder_params(k_param, latent_channels, channels_list, out_channels)
    x = jax.random.normal(k_x, (N, latent_channels, H, W), jnp.float32)

    out = jax.block_until_ready(decoder_forward(x, params))
    ref = decoder_ref(x, params)

    assert out.shape == (N, out_channels, 2 * H, 2 * W), out.shape
    assert out.dtype == jnp.float32
    max_err = float(jnp.max(jnp.abs(out - ref)))
    # bf16 matmul operands / bf16 inter-layer activations -> relaxed tolerance
    assert jnp.allclose(out, ref, atol=2e-2, rtol=2e-2), f"mismatch vs reference: {max_err}"

    print("KERNEL_OK")
</pallas_src>

<mosaic_0001>
module attributes {stable_mosaic.version = 11 : i64} {
  func.func @_conv3x3_kernel(%arg0: i32, %arg1: memref<1x18x18x4xbf16, #tpu.memory_space<vmem>>, %arg2: memref<36x32xbf16, #tpu.memory_space<vmem>>, %arg3: memref<1x32xf32, #tpu.memory_space<vmem>>, %arg4: memref<1x16x16x32xbf16, #tpu.memory_space<vmem>>) attributes {dimension_semantics = [#tpu.dimension_semantics<parallel>], iteration_bounds = array<i64: 2>, scalar_prefetch = 0 : i64, scratch_operands = 0 : i64, tpu.core_type = #tpu.core_type<tc>, window_params = [{transform_indices = @transform_0, window_bounds = array<i64: 1, 18, 18, 4>}, {pipeline_mode = #tpu.pipeline_mode<synchronous>, transform_indices = @transform_1, window_bounds = array<i64: 36, 32>}, {pipeline_mode = #tpu.pipeline_mode<synchronous>, transform_indices = @transform_2, window_bounds = array<i64: 1, 32>}, {transform_indices = @transform_3, window_bounds = array<i64: 1, 16, 16, 32>}]} {
    %c0 = arith.constant 0 : index
    %c0_0 = arith.constant 0 : index
    %c0_1 = arith.constant 0 : index
    %c0_2 = arith.constant 0 : index
    %0 = vector.load %arg1[%c0, %c0_0, %c0_1, %c0_2] : memref<1x18x18x4xbf16, #tpu.memory_space<vmem>>, vector<1x18x18x4xbf16>
    %1 = vector.shape_cast %0 : vector<1x18x18x4xbf16> to vector<18x18x4xbf16>
    %2 = vector.extract_strided_slice %1 {offsets = [0, 0, 0], sizes = [16, 16, 4], strides = [1, 1, 1]} : vector<18x18x4xbf16> to vector<16x16x4xbf16>
    %3 = vector.shape_cast %2 : vector<16x16x4xbf16> to vector<256x4xbf16>
    %4 = vector.extract_strided_slice %1 {offsets = [0, 1, 0], sizes = [16, 16, 4], strides = [1, 1, 1]} : vector<18x18x4xbf16> to vector<16x16x4xbf16>
    %5 = vector.shape_cast %4 : vector<16x16x4xbf16> to vector<256x4xbf16>
    %6 = vector.extract_strided_slice %1 {offsets = [0, 2, 0], sizes = [16, 16, 4], strides = [1, 1, 1]} : vector<18x18x4xbf16> to vector<16x16x4xbf16>
    %7 = vector.shape_cast %6 : vector<16x16x4xbf16> to vector<256x4xbf16>
    %8 = vector.extract_strided_slice %1 {offsets = [1, 0, 0], sizes = [16, 16, 4], strides = [1, 1, 1]} : vector<18x18x4xbf16> to vector<16x16x4xbf16>
    %9 = vector.shape_cast %8 : vector<16x16x4xbf16> to vector<256x4xbf16>
    %10 = vector.extract_strided_slice %1 {offsets = [1, 1, 0], sizes = [16, 16, 4], strides = [1, 1, 1]} : vector<18x18x4xbf16> to vector<16x16x4xbf16>
    %11 = vector.shape_cast %10 : vector<16x16x4xbf16> to vector<256x4xbf16>
    %12 = vector.extract_strided_slice %1 {offsets = [1, 2, 0], sizes = [16, 16, 4], strides = [1, 1, 1]} : vector<18x18x4xbf16> to vector<16x16x4xbf16>
    %13 = vector.shape_cast %12 : vector<16x16x4xbf16> to vector<256x4xbf16>
    %14 = vector.extract_strided_slice %1 {offsets = [2, 0, 0], sizes = [16, 16, 4], strides = [1, 1, 1]} : vector<18x18x4xbf16> to vector<16x16x4xbf16>
    %15 = vector.shape_cast %14 : vector<16x16x4xbf16> to vector<256x4xbf16>
    %16 = vector.extract_strided_slice %1 {offsets = [2, 1, 0], sizes = [16, 16, 4], strides = [1, 1, 1]} : vector<18x18x4xbf16> to vector<16x16x4xbf16>
    %17 = vector.shape_cast %16 : vector<16x16x4xbf16> to vector<256x4xbf16>
    %18 = vector.extract_strided_slice %1 {offsets = [2, 2, 0], sizes = [16, 16, 4], strides = [1, 1, 1]} : vector<18x18x4xbf16> to vector<16x16x4xbf16>
    %19 = vector.shape_cast %18 : vector<16x16x4xbf16> to vector<256x4xbf16>
    %20 = tpu.concatenate %3, %5, %7, %9, %11, %13, %15, %17, %19 in 1 : vector<256x4xbf16>, vector<256x4xbf16>, vector<256x4xbf16>, vector<256x4xbf16>, vector<256x4xbf16>, vector<256x4xbf16>, vector<256x4xbf16>, vector<256x4xbf16>, vector<256x4xbf16> -> vector<256x36xbf16>
    %c0_3 = arith.constant 0 : index
    %c0_4 = arith.constant 0 : index
    %21 = vector.load %arg2[%c0_3, %c0_4] : memref<36x32xbf16, #tpu.memory_space<vmem>>, vector<36x32xbf16>
    %cst = arith.constant dense<0.000000e+00> : vector<256x32xf32>
    %22 = tpu.matmul %20, %21, %cst {dimension_numbers = #tpu.dot_dimension_numbers<[1], [0], [0], [1], [0, 0, 1, 1], [], []>} : vector<256x36xbf16>, vector<36x32xbf16>, vector<256x32xf32> -> vector<256x32xf32>
    %c0_5 = arith.constant 0 : index
    %c0_6 = arith.constant 0 : index
    %23 = vector.load %arg3[%c0_5, %c0_6] : memref<1x32xf32, #tpu.memory_space<vmem>>, vector<1x32xf32>
    %24 = vector.shape_cast %23 : vector<1x32xf32> to vector<32xf32>
    %25 = vector.shape_cast %24 : vector<32xf32> to vector<1x32xf32>
    %26 = vector.broadcast %25 : vector<1x32xf32> to vector<256x32xf32>
    %27 = arith.addf %22, %26 : vector<256x32xf32>
    %cst_7 = arith.constant 0.000000e+00 : f32
    %28 = vector.broadcast %cst_7 : f32 to vector<256x32xf32>
    %29 = arith.maximumf %27, %28 : vector<256x32xf32>
    %30 = vector.shape_cast %29 : vector<256x32xf32> to vector<16x16x32xf32>
    %31 = arith.truncf %30 : vector<16x16x32xf32> to vector<16x16x32xbf16>
    %c0_8 = arith.constant 0 : index
    %c0_9 = arith.constant 0 : index
    %c0_10 = arith.constant 0 : index
    %c0_11 = arith.constant 0 : index
    %32 = vector.load %arg4[%c0_8, %c0_9, %c0_10, %c0_11] : memref<1x16x16x32xbf16, #tpu.memory_space<vmem>>, vector<1x16x16x32xbf16>
    %33 = vector.shape_cast %32 : vector<1x16x16x32xbf16> to vector<16x16x32xbf16>
    %34 = vector.shape_cast %31 : vector<16x16x32xbf16> to vector<1x16x16x32xbf16>
    tpu.vector_store %arg4[%c0_8, %c0_9, %c0_10, %c0_11], %34 {strides = array<i32>} : memref<1x16x16x32xbf16, #tpu.memory_space<vmem>>, vector<1x16x16x32xbf16>,
    return
  }
  func.func @transform_0(%arg0: i32) -> (i32, i32, i32, i32) {
    %c0_i32 = arith.constant 0 : i32
    %c0_i32_0 = arith.constant 0 : i32
    %c0_i32_1 = arith.constant 0 : i32
    %c0_i32_2 = arith.constant 0 : i32
    return %arg0, %c0_i32, %c0_i32_0, %c0_i32_1 : i32, i32, i32, i32
  }
  func.func @transform_1(%arg0: i32) -> (i32, i32) {
    %c0_i32 = arith.constant 0 : i32
    %c0_i32_0 = arith.constant 0 : i32
    %c0_i32_1 = arith.constant 0 : i32
    return %c0_i32, %c0_i32_0 : i32, i32
  }
  func.func @transform_2(%arg0: i32) -> (i32, i32) {
    %c0_i32 = arith.constant 0 : i32
    %c0_i32_0 = arith.constant 0 : i32
    %c0_i32_1 = arith.constant 0 : i32
    return %c0_i32, %c0_i32_0 : i32, i32
  }
  func.func @transform_3(%arg0: i32) -> (i32, i32, i32, i32) {
    %c0_i32 = arith.constant 0 : i32
    %c0_i32_0 = arith.constant 0 : i32
    %c0_i32_1 = arith.constant 0 : i32
    %c0_i32_2 = arith.constant 0 : i32
    return %arg0, %c0_i32, %c0_i32_0, %c0_i32_1 : i32, i32, i32, i32
  }
}

</mosaic_0001>

<llo_original>
// kernel: tpu_custom_call.1
$region0: #{tpu_custom_call.1}
  #allocation0 [shape = 'u32[]', space=smem, size = 0x4, offset = 0x4, fixed_abs, tag = 'smem constant byte address 0x4 - core index']
  #allocation1 [shape = 'u32[72,128]{1,0:T(1,128)}', space=vmem, size = 0x9000, scoped, tag = 'internal scratch']
  %s0 = inlined_call_operand.vmem [shape: bf16[2,18,18,4], index: 0, kind: input, shape index: {}]
  %s1 = inlined_call_operand.vmem [shape: bf16[36,32], index: 1, kind: input, shape index: {}]
  %s2 = inlined_call_operand.vmem [shape: f32[1,32], index: 2, kind: input, shape index: {}]
  %s3 = inlined_call_operand.hbm [shape: bf16[2,16,16,32], index: 3, kind: output, shape index: {}]
  %s4 = sld [smem:[#allocation0]]
  $region45: #{tpu_custom_call.1} parent=0
    _
  %s6 = ssub.s32 1, %s4
  %s7 = scalar_select 0, %s6, %s4
  $region1: #{tpu_custom_call.1} parent=0
    #allocation2 [shape = 'u8[131072]{0}', space=vmem, size = 0x20000, scoped, tag = 'output window, operand 0']
    #allocation3 [shape = 's32[2]{0}', space=sflag, size = 0x8, scoped, tag = 'scoped memory for tpu_custom_call.1']
    %8 = vsyncpa [#allocation3], 0
    %s9 = scalar_lea.sflag [#allocation3], 1
    %10 = vsyncpa %s9, 0
    loop: start=0, step=1, limit=4
    $region2: #{tpu_custom_call.1} parent=1 // loop_pre_header
      _
    $region3: #{tpu_custom_call.1} parent=1 // loop_header
      %s12 = sphi 0, %s16
      %p13 = scmp.ge.s32.totalorder %s12, 4
      %s22 = sphi 0, %s24
      %s25 = sphi 0, %s22
      %s26 = sphi 0, %s25
      %s42 = sphi 0, %s26
      %s46 = sphi 0, %s46
      %s48 = sphi 0, %s46
      %s49 = sphi 0, %s48
      %s63 = sphi 0, %s49
      %s67 = sphi 0, %s67
      %s69 = sphi 0, %s67
      %s70 = sphi 0, %s69
      %s84 = sphi 0, %s70
      %s90 = sphi 0, %s92
      %s93 = sphi 0, %s90
      %s94 = sphi 0, %s93
      %s110 = sphi 0, %s94
    $region4: #{tpu_custom_call.1} parent=1 // loop_header_branch
      %15 = sbr.rel (%p13) target = $region8
    $region5: #{tpu_custom_call.1} parent=1 // loop_body
      %s17 = ssub.s32 %s12, 1
      %s18 = ssub.s32 %s12, 2
      %s19 = sadd.s32 %s12, 1
      %s20 = ssub.s32 %s12, %s19
      %p21 = scmp.eq.s32.totalorder %s20, 0
      %s23 = sadd.s32 %s22, 1
      %s24 = scalar_select %p21, %s22, %s23
      %p27 = pneg %p21
      %p28 = scmp.eq.s32.totalorder %s12, 1
      %p29 = por %p27, %p28
      %p30 = scmp.ne.s32.totalorder %s22, %s25
      %p31 = scmp.eq.s32.totalorder %s12, 0
      %p32 = por %p30, %p31
      %p33 = scmp.ne.s32.totalorder %s22, %s25
      %p34 = scmp.eq.s32.totalorder %s17, 1
      %p35 = por %p33, %p34
      %p36 = scmp.ne.s32.totalorder %s25, %s26
      %p37 = scmp.eq.s32.totalorder %s17, 0
      %p38 = por %p36, %p37
      %p39 = scmp.ne.s32.totalorder %s25, %s26
      %p40 = scmp.eq.s32.totalorder %s18, 1
      %p41 = por %p39, %p40
      %p43 = scmp.ne.s32.totalorder %s26, %s42
      %p44 = scmp.eq.s32.totalorder %s18, 0
      %p45 = por %p43, %p44
      %s47 = sadd.s32 %s46, 1
      %p50 = scmp.eq.s32.totalorder %s12, 1
      %p51 = scmp.ne.s32.totalorder %s46, %s48
      %p52 = scmp.eq.s32.totalorder %s12, 0
      %p53 = por %p51, %p52
      %p54 = scmp.ne.s32.totalorder %s46, %s48
      %p55 = scmp.eq.s32.totalorder %s17, 1
      %p56 = por %p54, %p55
      %p57 = scmp.ne.s32.totalorder %s48, %s49
      %p58 = scmp.eq.s32.totalorder %s17, 0
      %p59 = por %p57, %p58
      %p60 = scmp.ne.s32.totalorder %s48, %s49
      %p61 = scmp.eq.s32.totalorder %s18, 1
      %p62 = por %p60, %p61
      %p64 = scmp.ne.s32.totalorder %s49, %s63
      %p65 = scmp.eq.s32.totalorder %s18, 0
      %p66 = por %p64, %p65
      %s68 = sadd.s32 %s67, 1
      %p71 = scmp.eq.s32.totalorder %s12, 1
      %p72 = scmp.ne.s32.totalorder %s67, %s69
      %p73 = scmp.eq.s32.totalorder %s12, 0
      %p74 = por %p72, %p73
      %p75 = scmp.ne.s32.totalorder %s67, %s69
      %p76 = scmp.eq.s32.totalorder %s17, 1
      %p77 = por %p75, %p76
      %p78 = scmp.ne.s32.totalorder %s69, %s70
      %p79 = scmp.eq.s32.totalorder %s17, 0
      %p80 = por %p78, %p79
      %p81 = scmp.ne.s32.totalorder %s69, %s70
      %p82 = scmp.eq.s32.totalorder %s18, 1
      %p83 = por %p81, %p82
      %p85 = scmp.ne.s32.totalorder %s70, %s84
      %p86 = scmp.eq.s32.totalorder %s18, 0
      %p87 = por %p85, %p86
      %s88 = ssub.s32 %s12, %s19
      %p89 = scmp.eq.s32.totalorder %s88, 0
      %s91 = sadd.s32 %s90, 1
      %s92 = scalar_select %p89, %s90, %s91
      %p95 = pneg %p89
      %p96 = scmp.eq.s32.totalorder %s12, 1
      %p97 = por %p95, %p96
      %p98 = scmp.ne.s32.totalorder %s90, %s93
      %p99 = scmp.eq.s32.totalorder %s12, 0
      %p100 = por %p98, %p99
      %p101 = scmp.ne.s32.totalorder %s90, %s93
      %p102 = scmp.eq.s32.totalorder %s17, 1
      %p103 = por %p101, %p102
      %p104 = scmp.ne.s32.totalorder %s93, %s94
      %p105 = scmp.eq.s32.totalorder %s17, 0
      %p106 = por %p104, %p105
      %p107 = scmp.ne.s32.totalorder %s93, %s94
      %p108 = scmp.eq.s32.totalorder %s18, 1
      %p109 = por %p107, %p108
      %p111 = scmp.ne.s32.totalorder %s94, %s110
      %p112 = scmp.eq.s32.totalorder %s18, 0
      %p113 = por %p111, %p112
      %p114 = scmp.le.s32.totalorder 1, %s12
      %p115 = scmp.lt.s32.totalorder %s12, 3
      %p116 = pnand %p114, %p115
      %p117 = pneg %p116
      // Predicated region
      $region9: #{tpu_custom_call.1} parent=5 // pred_check
        _
      $region10: #{tpu_custom_call.1} parent=5 // pred_check_branch
        %119 = sbr.rel (%p116) target = $region12
      $region11: #{tpu_custom_call.1} parent=5 // pred_region
        %s120 = ssub.s32 %s12, 1
        // Predicated region
        $region13: #{tpu_custom_call.1} parent=11 // pred_check
          %p121 = pneg %p59
        $region14: #{tpu_custom_call.1} parent=11 // pred_check_branch
          %123 = sbr.rel (%p121) target = $region16
        $region15: #{tpu_custom_call.1} parent=11 // pred_region
          _
        $region16: #{tpu_custom_call.1} parent=11 // pred_fallthru
          _
        // Predicated region
        $region17: #{tpu_custom_call.1} parent=11 // pred_check
          %p124 = pneg %p80
        $region18: #{tpu_custom_call.1} parent=11 // pred_check_branch
          %126 = sbr.rel (%p124) target = $region20
        $region19: #{tpu_custom_call.1} parent=11 // pred_region
          _
        $region20: #{tpu_custom_call.1} parent=11 // pred_fallthru
          _
      $region12: #{tpu_custom_call.1} parent=5 // pred_fallthru
        _
      %p127 = scmp.lt.s32.totalorder %s12, 2
      // Predicated region
      $region21: #{tpu_custom_call.1} parent=5 // pred_check
        %p128 = pneg %p127
      $region22: #{tpu_custom_call.1} parent=5 // pred_check_branch
        %130 = sbr.rel (%p128) target = $region24
      $region23: #{tpu_custom_call.1} parent=5 // pred_region
        // Predicated region
        $region25: #{tpu_custom_call.1} parent=23 // pred_check
          %p131 = pneg %p32
        $region26: #{tpu_custom_call.1} parent=23 // pred_check_branch
          %133 = sbr.rel (%p131) target = $region28
        $region27: #{tpu_custom_call.1} parent=23 // pred_region
          %p134 = scmp.lt.s32.totalorder %s12, 1
          %s135 = scalar_select %p134, %s12, 1
          %s136 = smul.addr %s135, 54
          %s137 = smul.addr %s136, 4
          %s138 = scalar_lea.vmem %s0, %s137
        $region28: #{tpu_custom_call.1} parent=23 // pred_fallthru
          _
      $region24: #{tpu_custom_call.1} parent=5 // pred_fallthru
        _
      %p139 = scmp.le.s32.totalorder 1, %s12
      %p140 = scmp.lt.s32.totalorder %s12, 3
      %p141 = pnand %p139, %p140
      %p142 = pneg %p141
      // Predicated region
      $region29: #{tpu_custom_call.1} parent=5 // pred_check
        _
      $region30: #{tpu_custom_call.1} parent=5 // pred_check_branch
        %144 = sbr.rel (%p141) target = $region32
      $region31: #{tpu_custom_call.1} parent=5 // pred_region
        %s145 = ssub.s32 %s12, 1
        %p146 = scmp.lt.s32.totalorder %s17, 1
        %s147 = scalar_select %p146, %s17, 1
        %s148 = smul.addr %s147, 54
        %s149 = smul.addr %s148, 4
        %s150 = scalar_lea.vmem %s0, %s149
        %p151 = pneg %p38
        %p152 = pneg %p35
        %p153 = pneg %p59
        %p154 = pneg %p56
        %p155 = pneg %p80
        %p156 = pneg %p77
        %p157 = pneg %p106
        %p158 = pneg %p103
        %s159 = sand.u32 %s93, 1
        %s160 = scalar_lea.sflag [#allocation3], %s159
        %s161 = sand.u32 %s93, 1
        %s162 = smul.addr %s161, 128
        %s163 = scalar_lea.vmem [#allocation2], %s162
        %p164 = scmp.lt.s32.totalorder %s17, 1
        %s165 = scalar_select %p164, %s17, 1
        %s166 = smul.addr %s165, 54
        %s167 = smul.addr %s166, 4
        %s168 = scalar_lea.vmem %s0, %s167
        %v170 = vld [vmem:[%s168] sm:$0xf]
        %v171 = vld [vmem:[%s168 + $0x4] sm:$0xf]
        %v172 = vld [vmem:[%s168 + $0x8] sm:$0x1]
        %v173 = vld [vmem:[%s168 + $0xc] sm:$0xf]
        %v174 = vld [vmem:[%s168 + $0x10] sm:$0xf]
        %v175 = vld [vmem:[%s168 + $0x14] sm:$0x1]
        %v176 = vld [vmem:[%s168 + $0x18] sm:$0xf]
        %v177 = vld [vmem:[%s168 + $0x1c] sm:$0xf]
        %v178 = vld [vmem:[%s168 + $0x20] sm:$0x1]
        %v179 = vld [vmem:[%s168 + $0x24] sm:$0xf]
        %v180 = vld [vmem:[%s168 + $0x28] sm:$0xf]
        %v181 = vld [vmem:[%s168 + $0x2c] sm:$0x1]
        %v182 = vld [vmem:[%s168 + $0x30] sm:$0xf]
        %v183 = vld [vmem:[%s168 + $0x34] sm:$0xf]
        %v184 = vld [vmem:[%s168 + $0x38] sm:$0x1]
        %v185 = vld [vmem:[%s168 + $0x3c] sm:$0xf]
        %v186 = vld [vmem:[%s168 + $0x40] sm:$0xf]
        %v187 = vld [vmem:[%s168 + $0x44] sm:$0x1]
        %v188 = vld [vmem:[%s168 + $0x48] sm:$0xf]
        %v189 = vld [vmem:[%s168 + $0x4c] sm:$0xf]
        %v190 = vld [vmem:[%s168 + $0x50] sm:$0x1]
        %v191 = vld [vmem:[%s168 + $0x54] sm:$0xf]
        %v192 = vld [vmem:[%s168 + $0x58] sm:$0xf]
        %v193 = vld [vmem:[%s168 + $0x5c] sm:$0x1]
        %v194 = vld [vmem:[%s168 + $0x60] sm:$0xf]
        %v195 = vld [vmem:[%s168 + $0x64] sm:$0xf]
        %v196 = vld [vmem:[%s168 + $0x68] sm:$0x1]
        %v197 = vld [vmem:[%s168 + $0x6c] sm:$0xf]
        %v198 = vld [vmem:[%s168 + $0x70] sm:$0xf]
        %v199 = vld [vmem:[%s168 + $0x74] sm:$0x1]
        %v200 = vld [vmem:[%s168 + $0x78] sm:$0xf]
        %v201 = vld [vmem:[%s168 + $0x7c] sm:$0xf]
        %v202 = vld [vmem:[%s168 + $0x80] sm:$0x1]
        %v203 = vld [vmem:[%s168 + $0x84] sm:$0xf]
        %v204 = vld [vmem:[%s168 + $0x88] sm:$0xf]
        %v205 = vld [vmem:[%s168 + $0x8c] sm:$0x1]
        %v206 = vld [vmem:[%s168 + $0x90] sm:$0xf]
        %v207 = vld [vmem:[%s168 + $0x94] sm:$0xf]
        %v208 = vld [vmem:[%s168 + $0x98] sm:$0x1]
        %v209 = vld [vmem:[%s168 + $0x9c] sm:$0xf]
        %v210 = vld [vmem:[%s168 + $0xa0] sm:$0xf]
        %v211 = vld [vmem:[%s168 + $0xa4] sm:$0x1]
        %v212 = vld [vmem:[%s168 + $0xa8] sm:$0xf]
        %v213 = vld [vmem:[%s168 + $0xac] sm:$0xf]
        %v214 = vld [vmem:[%s168 + $0xb0] sm:$0x1]
        %v215 = vld [vmem:[%s168 + $0xb4] sm:$0xf]
        %v216 = vld [vmem:[%s168 + $0xb8] sm:$0xf]
        %v217 = vld [vmem:[%s168 + $0xbc] sm:$0x1]
        %v218 = vld [vmem:[%s168 + $0xc0] sm:$0xf]
        %v219 = vld [vmem:[%s168 + $0xc4] sm:$0xf]
        %v220 = vld [vmem:[%s168 + $0xc8] sm:$0x1]
        %v221 = vld [vmem:[%s168 + $0xcc] sm:$0xf]
        %v222 = vld [vmem:[%s168 + $0xd0] sm:$0xf]
        %v223 = vld [vmem:[%s168 + $0xd4] sm:$0x1]
        %vm224 = vsmask.f32 3328
        %vm225 = vsmask.f32 7440
        %vm226 = vmor %vm224, %vm225
        %v228 = vshrl.u32 %v170, 16
        %v230 = vrot.slane %v228, 4
        %v231 = vshll.u32 %v170, 16
        %v233 = vrot.slane %v231, 5
        %v234 = vor.u32 %v230, %v233
        %v235 = vrot.slane %v234, 4
        %v237 = vshll.u32 %v171, 16
        %v239 = vrot.slane %v237, 5
        %v240 = vsel %vm226, %v235, %v239
        %v241 = vshrl.u32 %v171, 16
        %v243 = vrot.slane %v241, 4
        %v244 = vor.u32 %v243, %v239
        %v245 = vrot.slane %v244, 4
        %v247 = vshll.u32 %v172, 16
        %v249 = vrot.slane %v247, 5
        %v250 = vsel %vm226, %v245, %v249
        %v252 = vshrl.u32 %v173, 16
        %v254 = vrot.slane %v252, 4
        %v255 = vshll.u32 %v173, 16
        %v257 = vrot.slane %v255, 5
        %v258 = vor.u32 %v254, %v257
        %v259 = vrot.slane %v258, 4
        %v261 = vshll.u32 %v174, 16
        %v263 = vrot.slane %v261, 5
        %v264 = vsel %vm226, %v259, %v263
        %v265 = vshrl.u32 %v174, 16
        %v267 = vrot.slane %v265, 4
        %v268 = vor.u32 %v267, %v263
        %v269 = vrot.slane %v268, 4
        %v271 = vshll.u32 %v175, 16
        %v273 = vrot.slane %v271, 5
        %v274 = vsel %vm226, %v269, %v273
        %v276 = vshrl.u32 %v176, 16
        %v278 = vrot.slane %v276, 4
        %v279 = vshll.u32 %v176, 16
        %v281 = vrot.slane %v279, 5
        %v282 = vor.u32 %v278, %v281
        %v283 = vrot.slane %v282, 4
        %v285 = vshll.u32 %v177, 16
        %v287 = vrot.slane %v285, 5
        %v288 = vsel %vm226, %v283, %v287
        %v289 = vshrl.u32 %v177, 16
        %v291 = vrot.slane %v289, 4
        %v292 = vor.u32 %v291, %v287
        %v293 = vrot.slane %v292, 4
        %v295 = vshll.u32 %v178, 16
        %v297 = vrot.slane %v295, 5
        %v298 = vsel %vm226, %v293, %v297
        %v300 = vshrl.u32 %v179, 16
        %v302 = vrot.slane %v300, 4
        %v303 = vshll.u32 %v179, 16
        %v305 = vrot.slane %v303, 5
        %v306 = vor.u32 %v302, %v305
        %v307 = vrot.slane %v306, 4
        %v309 = vshll.u32 %v180, 16
        %v311 = vrot.slane %v309, 5
        %v312 = vsel %vm226, %v307, %v311
        %v313 = vshrl.u32 %v180, 16
        %v315 = vrot.slane %v313, 4
        %v316 = vor.u32 %v315, %v311
        %v317 = vrot.slane %v316, 4
        %v319 = vshll.u32 %v181, 16
        %v321 = vrot.slane %v319, 5
        %v322 = vsel %vm226, %v317, %v321
        %v324 = vshrl.u32 %v182, 16
        %v326 = vrot.slane %v324, 4
        %v327 = vshll.u32 %v182, 16
        %v329 = vrot.slane %v327, 5
        %v330 = vor.u32 %v326, %v329
        %v331 = vrot.slane %v330, 4
        %v333 = vshll.u32 %v183, 16
        %v335 = vrot.slane %v333, 5
        %v336 = vsel %vm226, %v331, %v335
        %v337 = vshrl.u32 %v183, 16
        %v339 = vrot.slane %v337, 4
        %v340 = vor.u32 %v339, %v335
        %v341 = vrot.slane %v340, 4
        %v343 = vshll.u32 %v184, 16
        %v345 = vrot.slane %v343, 5
        %v346 = vsel %vm226, %v341, %v345
        %v348 = vshrl.u32 %v185, 16
        %v350 = vrot.slane %v348, 4
        %v351 = vshll.u32 %v185, 16
        %v353 = vrot.slane %v351, 5
        %v354 = vor.u32 %v350, %v353
        %v355 = vrot.slane %v354, 4
        %v357 = vshll.u32 %v186, 16
        %v359 = vrot.slane %v357, 5
        %v360 = vsel %vm226, %v355, %v359
        %v361 = vshrl.u32 %v186, 16
        %v363 = vrot.slane %v361, 4
        %v364 = vor.u32 %v363, %v359
        %v365 = vrot.slane %v364, 4
        %v367 = vshll.u32 %v187, 16
        %v369 = vrot.slane %v367, 5
        %v370 = vsel %vm226, %v365, %v369
        %v372 = vshrl.u32 %v188, 16
        %v374 = vrot.slane %v372, 4
        %v375 = vshll.u32 %v188, 16
        %v377 = vrot.slane %v375, 5
        %v378 = vor.u32 %v374, %v377
        %v379 = vrot.slane %v378, 4
        %v381 = vshll.u32 %v189, 16
        %v383 = vrot.slane %v381, 5
        %v384 = vsel %vm226, %v379, %v383
        %v385 = vshrl.u32 %v189, 16
        %v387 = vrot.slane %v385, 4
        %v388 = vor.u32 %v387, %v383
        %v389 = vrot.slane %v388, 4
        %v391 = vshll.u32 %v190, 16
        %v393 = vrot.slane %v391, 5
        %v394 = vsel %vm226, %v389, %v393
        %v396 = vshrl.u32 %v191, 16
        %v398 = vrot.slane %v396, 4
        %v399 = vshll.u32 %v191, 16
        %v401 = vrot.slane %v399, 5
        %v402 = vor.u32 %v398, %v401
        %v403 = vrot.slane %v402, 4
        %v405 = vshll.u32 %v192, 16
        %v407 = vrot.slane %v405, 5
        %v408 = vsel %vm226, %v403, %v407
        %v409 = vshrl.u32 %v192, 16
        %v411 = vrot.slane %v409, 4
        %v412 = vor.u32 %v411, %v407
        %v413 = vrot.slane %v412, 4
        %v415 = vshll.u32 %v193, 16
        %v417 = vrot.slane %v415, 5
        %v418 = vsel %vm226, %v413, %v417
        %v420 = vshrl.u32 %v194, 16
        %v422 = vrot.slane %v420, 4
        %v423 = vshll.u32 %v194, 16
        %v425 = vrot.slane %v423, 5
        %v426 = vor.u32 %v422, %v425
        %v427 = vrot.slane %v426, 4
        %v429 = vshll.u32 %v195, 16
        %v431 = vrot.slane %v429, 5
        %v432 = vsel %vm226, %v427, %v431
        %v433 = vshrl.u32 %v195, 16
        %v435 = vrot.slane %v433, 4
        %v436 = vor.u32 %v435, %v431
        %v437 = vrot.slane %v436, 4
        %v439 = vshll.u32 %v196, 16
        %v441 = vrot.slane %v439, 5
        %v442 = vsel %vm226, %v437, %v441
        %v444 = vshrl.u32 %v197, 16
        %v446 = vrot.slane %v444, 4
        %v447 = vshll.u32 %v197, 16
        %v449 = vrot.slane %v447, 5
        %v450 = vor.u32 %v446, %v449
        %v451 = vrot.slane %v450, 4
        %v453 = vshll.u32 %v198, 16
        %v455 = vrot.slane %v453, 5
        %v456 = vsel %vm226, %v451, %v455
        %v457 = vshrl.u32 %v198, 16
        %v459 = vrot.slane %v457, 4
        %v460 = vor.u32 %v459, %v455
        %v461 = vrot.slane %v460, 4
        %v463 = vshll.u32 %v199, 16
        %v465 = vrot.slane %v463, 5
        %v466 = vsel %vm226, %v461, %v465
        %v468 = vshrl.u32 %v200, 16
        %v470 = vrot.slane %v468, 4
        %v471 = vshll.u32 %v200, 16
        %v473 = vrot.slane %v471, 5
        %v474 = vor.u32 %v470, %v473
        %v475 = vrot.slane %v474, 4
        %v477 = vshll.u32 %v201, 16
        %v479 = vrot.slane %v477, 5
        %v480 = vsel %vm226, %v475, %v479
        %v481 = vshrl.u32 %v201, 16
        %v483 = vrot.slane %v481, 4
        %v484 = vor.u32 %v483, %v479
        %v485 = vrot.slane %v484, 4
        %v487 = vshll.u32 %v202, 16
        %v489 = vrot.slane %v487, 5
        %v490 = vsel %vm226, %v485, %v489
        %v492 = vshrl.u32 %v203, 16
        %v494 = vrot.slane %v492, 4
        %v495 = vshll.u32 %v203, 16
        %v497 = vrot.slane %v495, 5
        %v498 = vor.u32 %v494, %v497
        %v499 = vrot.slane %v498, 4
        %v501 = vshll.u32 %v204, 16
        %v503 = vrot.slane %v501, 5
        %v504 = vsel %vm226, %v499, %v503
        %v505 = vshrl.u32 %v204, 16
        %v507 = vrot.slane %v505, 4
        %v508 = vor.u32 %v507, %v503
        %v509 = vrot.slane %v508, 4
        %v511 = vshll.u32 %v205, 16
        %v513 = vrot.slane %v511, 5
        %v514 = vsel %vm226, %v509, %v513
        %v516 = vshrl.u32 %v206, 16
        %v518 = vrot.slane %v516, 4
        %v519 = vshll.u32 %v206, 16
        %v521 = vrot.slane %v519, 5
        %v522 = vor.u32 %v518, %v521
        %v523 = vrot.slane %v522, 4
        %v525 = vshll.u32 %v207, 16
        %v527 = vrot.slane %v525, 5
        %v528 = vsel %vm226, %v523, %v527
        %v529 = vshrl.u32 %v207, 16
        %v531 = vrot.slane %v529, 4
        %v532 = vor.u32 %v531, %v527
        %v533 = vrot.slane %v532, 4
        %v535 = vshll.u32 %v208, 16
        %v537 = vrot.slane %v535, 5
        %v538 = vsel %vm226, %v533, %v537
        %v540 = vshrl.u32 %v209, 16
        %v542 = vrot.slane %v540, 4
        %v543 = vshll.u32 %v209, 16
        %v545 = vrot.slane %v543, 5
        %v546 = vor.u32 %v542, %v545
        %v547 = vrot.slane %v546, 4
        %v549 = vshll.u32 %v210, 16
        %v551 = vrot.slane %v549, 5
        %v552 = vsel %vm226, %v547, %v551
        %v553 = vshrl.u32 %v210, 16
        %v555 = vrot.slane %v553, 4
        %v556 = vor.u32 %v555, %v551
        %v557 = vrot.slane %v556, 4
        %v559 = vshll.u32 %v211, 16
        %v561 = vrot.slane %v559, 5
        %v562 = vsel %vm226, %v557, %v561
        %v564 = vshrl.u32 %v212, 16
        %v566 = vrot.slane %v564, 4
        %v567 = vshll.u32 %v212, 16
        %v569 = vrot.slane %v567, 5
        %v570 = vor.u32 %v566, %v569
        %v571 = vrot.slane %v570, 4
        %v573 = vshll.u32 %v213, 16
        %v575 = vrot.slane %v573, 5
        %v576 = vsel %vm226, %v571, %v575
        %v577 = vshrl.u32 %v213, 16
        %v579 = vrot.slane %v577, 4
        %v580 = vor.u32 %v579, %v575
        %v581 = vrot.slane %v580, 4
        %v583 = vshll.u32 %v214, 16
        %v585 = vrot.slane %v583, 5
        %v586 = vsel %vm226, %v581, %v585
        %v588 = vshrl.u32 %v215, 16
        %v590 = vrot.slane %v588, 4
        %v591 = vshll.u32 %v215, 16
        %v593 = vrot.slane %v591, 5
        %v594 = vor.u32 %v590, %v593
        %v595 = vrot.slane %v594, 4
        %v597 = vshll.u32 %v216, 16
        %v599 = vrot.slane %v597, 5
        %v600 = vsel %vm226, %v595, %v599
        %v601 = vshrl.u32 %v216, 16
        %v603 = vrot.slane %v601, 4
        %v604 = vor.u32 %v603, %v599
        %v605 = vrot.slane %v604, 4
        %v607 = vshll.u32 %v217, 16
        %v609 = vrot.slane %v607, 5
        %v610 = vsel %vm226, %v605, %v609
        %vm659 = vcmask 1042432
        %vm660 = vcmask 1046532
        %vm661 = vmor %vm659, %vm660
        %v662 = vrot.slane %v170, 5
        %v663 = vrot.slane %v662, 4
        %v664 = vrot.slane %v171, 5
        %v665 = vsel %vm661, %v663, %v664
        %v666 = vrot.slane %v664, 4
        %v667 = vrot.slane %v172, 5
        %v668 = vsel %vm661, %v666, %v667
        %v669 = vrot.slane %v173, 5
        %v670 = vrot.slane %v669, 4
        %v671 = vrot.slane %v174, 5
        %v672 = vsel %vm661, %v670, %v671
        %v673 = vrot.slane %v671, 4
        %v674 = vrot.slane %v175, 5
        %v675 = vsel %vm661, %v673, %v674
        %v676 = vrot.slane %v176, 5
        %v677 = vrot.slane %v676, 4
        %v678 = vrot.slane %v177, 5
        %v679 = vsel %vm661, %v677, %v678
        %v680 = vrot.slane %v678, 4
        %v681 = vrot.slane %v178, 5
        %v682 = vsel %vm661, %v680, %v681
        %v683 = vrot.slane %v179, 5
        %v684 = vrot.slane %v683, 4
        %v685 = vrot.slane %v180, 5
        %v686 = vsel %vm661, %v684, %v685
        %v687 = vrot.slane %v685, 4
        %v688 = vrot.slane %v181, 5
        %v689 = vsel %vm661, %v687, %v688
        %v690 = vrot.slane %v182, 5
        %v691 = vrot.slane %v690, 4
        %v692 = vrot.slane %v183, 5
        %v693 = vsel %vm661, %v691, %v692
        %v694 = vrot.slane %v692, 4
        %v695 = vrot.slane %v184, 5
        %v696 = vsel %vm661, %v694, %v695
        %v697 = vrot.slane %v185, 5
        %v698 = vrot.slane %v697, 4
        %v699 = vrot.slane %v186, 5
        %v700 = vsel %vm661, %v698, %v699
        %v701 = vrot.slane %v699, 4
        %v702 = vrot.slane %v187, 5
        %v703 = vsel %vm661, %v701, %v702
        %v704 = vrot.slane %v188, 5
        %v705 = vrot.slane %v704, 4
        %v706 = vrot.slane %v189, 5
        %v707 = vsel %vm661, %v705, %v706
        %v708 = vrot.slane %v706, 4
        %v709 = vrot.slane %v190, 5
        %v710 = vsel %vm661, %v708, %v709
        %v711 = vrot.slane %v191, 5
        %v712 = vrot.slane %v711, 4
        %v713 = vrot.slane %v192, 5
        %v714 = vsel %vm661, %v712, %v713
        %v715 = vrot.slane %v713, 4
        %v716 = vrot.slane %v193, 5
        %v717 = vsel %vm661, %v715, %v716
        %v718 = vrot.slane %v194, 5
        %v719 = vrot.slane %v718, 4
        %v720 = vrot.slane %v195, 5
        %v721 = vsel %vm661, %v719, %v720
        %v722 = vrot.slane %v720, 4
        %v723 = vrot.slane %v196, 5
        %v724 = vsel %vm661, %v722, %v723
        %v725 = vrot.slane %v197, 5
        %v726 = vrot.slane %v725, 4
        %v727 = vrot.slane %v198, 5
        %v728 = vsel %vm661, %v726, %v727
        %v729 = vrot.slane %v727, 4
        %v730 = vrot.slane %v199, 5
        %v731 = vsel %vm661, %v729, %v730
        %v732 = vrot.slane %v200, 5
        %v733 = vrot.slane %v732, 4
        %v734 = vrot.slane %v201, 5
        %v735 = vsel %vm661, %v733, %v734
        %v736 = vrot.slane %v734, 4
        %v737 = vrot.slane %v202, 5
        %v738 = vsel %vm661, %v736, %v737
        %v739 = vrot.slane %v203, 5
        %v740 = vrot.slane %v739, 4
        %v741 = vrot.slane %v204, 5
        %v742 = vsel %vm661, %v740, %v741
        %v743 = vrot.slane %v741, 4
        %v744 = vrot.slane %v205, 5
        %v745 = vsel %vm661, %v743, %v744
        %v746 = vrot.slane %v206, 5
        %v747 = vrot.slane %v746, 4
        %v748 = vrot.slane %v207, 5
        %v749 = vsel %vm661, %v747, %v748
        %v750 = vrot.slane %v748, 4
        %v751 = vrot.slane %v208, 5
        %v752 = vsel %vm661, %v750, %v751
        %v753 = vrot.slane %v209, 5
        %v754 = vrot.slane %v753, 4
        %v755 = vrot.slane %v210, 5
        %v756 = vsel %vm661, %v754, %v755
        %v757 = vrot.slane %v755, 4
        %v758 = vrot.slane %v211, 5
        %v759 = vsel %vm661, %v757, %v758
        %v760 = vrot.slane %v212, 5
        %v761 = vrot.slane %v760, 4
        %v762 = vrot.slane %v213, 5
        %v763 = vsel %vm661, %v761, %v762
        %v764 = vrot.slane %v762, 4
        %v765 = vrot.slane %v214, 5
        %v766 = vsel %vm661, %v764, %v765
        %v767 = vrot.slane %v215, 5
        %v768 = vrot.slane %v767, 4
        %v769 = vrot.slane %v216, 5
        %v770 = vsel %vm661, %v768, %v769
        %v771 = vrot.slane %v769, 4
        %v772 = vrot.slane %v217, 5
        %v773 = vsel %vm661, %v771, %v772
        %v775 = vshrl.u32 %v218, 16
        %v777 = vrot.slane %v775, 4
        %v778 = vshll.u32 %v218, 16
        %v780 = vrot.slane %v778, 5
        %v781 = vor.u32 %v777, %v780
        %v782 = vrot.slane %v781, 4
        %v784 = vshll.u32 %v219, 16
        %v786 = vrot.slane %v784, 5
        %v787 = vsel %vm226, %v782, %v786
        %v788 = vshrl.u32 %v219, 16
        %v790 = vrot.slane %v788, 4
        %v791 = vor.u32 %v790, %v786
        %v792 = vrot.slane %v791, 4
        %v794 = vshll.u32 %v220, 16
        %v796 = vrot.slane %v794, 5
        %v797 = vsel %vm226, %v792, %v796
        %v801 = vrot.slane %v218, 5
        %v802 = vrot.slane %v801, 4
        %v803 = vrot.slane %v219, 5
        %v804 = vsel %vm661, %v802, %v803
        %v805 = vrot.slane %v803, 4
        %v806 = vrot.slane %v220, 5
        %v807 = vsel %vm661, %v805, %v806
        %v809 = vshrl.u32 %v221, 16
        %v811 = vrot.slane %v809, 4
        %v812 = vshll.u32 %v221, 16
        %v814 = vrot.slane %v812, 5
        %v815 = vor.u32 %v811, %v814
        %v816 = vrot.slane %v815, 4
        %v818 = vshll.u32 %v222, 16
        %v820 = vrot.slane %v818, 5
        %v821 = vsel %vm226, %v816, %v820
        %v822 = vshrl.u32 %v222, 16
        %v824 = vrot.slane %v822, 4
        %v825 = vor.u32 %v824, %v820
        %v826 = vrot.slane %v825, 4
        %v828 = vshll.u32 %v223, 16
        %v830 = vrot.slane %v828, 5
        %v831 = vsel %vm226, %v826, %v830
        %v835 = vrot.slane %v221, 5
        %v836 = vrot.slane %v835, 4
        %v837 = vrot.slane %v222, 5
        %v838 = vsel %vm661, %v836, %v837
        %v839 = vrot.slane %v837, 4
        %v840 = vrot.slane %v223, 5
        %v841 = vsel %vm661, %v839, %v840
        %v842 = vunpack.c.l.b16 %v170
        %v843 = vunpack.c.l.b16 %v171
        %v844 = vunpack.c.l.b16 %v173
        %v845 = vunpack.c.l.b16 %v174
        %v846 = vunpack.c.l.b16 %v176
        %v847 = vunpack.c.l.b16 %v177
        %v848 = vunpack.c.l.b16 %v179
        %v849 = vunpack.c.l.b16 %v180
        %v850 = vunpack.c.l.b16 %v182
        %v851 = vunpack.c.l.b16 %v183
        %v852 = vunpack.c.l.b16 %v185
        %v853 = vunpack.c.l.b16 %v186
        %v854 = vunpack.c.l.b16 %v188
        %v855 = vunpack.c.l.b16 %v189
        %v856 = vunpack.c.l.b16 %v191
        %v857 = vunpack.c.l.b16 %v192
        %v858 = vunpack.c.l.b16 %v194
        %v859 = vunpack.c.l.b16 %v195
        %v860 = vunpack.c.l.b16 %v197
        %v861 = vunpack.c.l.b16 %v198
        %v862 = vunpack.c.l.b16 %v200
        %v863 = vunpack.c.l.b16 %v201
        %v864 = vunpack.c.l.b16 %v203
        %v865 = vunpack.c.l.b16 %v204
        %v866 = vunpack.c.l.b16 %v206
        %v867 = vunpack.c.l.b16 %v207
        %v868 = vunpack.c.l.b16 %v209
        %v869 = vunpack.c.l.b16 %v210
        %v870 = vunpack.c.l.b16 %v212
        %v871 = vunpack.c.l.b16 %v213
        %v872 = vunpack.c.l.b16 %v215
        %v873 = vunpack.c.l.b16 %v216
        %v874 = vpack.c.b16 %v843, %v842
        %v875 = vpack.c.b16 %v845, %v844
        %v876 = vpack.c.b16 %v847, %v846
        %v877 = vpack.c.b16 %v849, %v848
        %v878 = vpack.c.b16 %v851, %v850
        %v879 = vpack.c.b16 %v853, %v852
        %v880 = vpack.c.b16 %v855, %v854
        %v881 = vpack.c.b16 %v857, %v856
        %v882 = vpack.c.b16 %v859, %v858
        %v883 = vpack.c.b16 %v861, %v860
        %v884 = vpack.c.b16 %v863, %v862
        %v885 = vpack.c.b16 %v865, %v864
        %v886 = vpack.c.b16 %v867, %v866
        %v887 = vpack.c.b16 %v869, %v868
        %v888 = vpack.c.b16 %v871, %v870
        %v889 = vpack.c.b16 %v873, %v872
        %v890 = vunpack.c.l.b16 %v240
        %v891 = vunpack.c.l.b16 %v250
        %v892 = vunpack.c.l.b16 %v264
        %v893 = vunpack.c.l.b16 %v274
        %v894 = vunpack.c.l.b16 %v288
        %v895 = vunpack.c.l.b16 %v298
        %v896 = vunpack.c.l.b16 %v312
        %v897 = vunpack.c.l.b16 %v322
        %v898 = vunpack.c.l.b16 %v336
        %v899 = vunpack.c.l.b16 %v346
        %v900 = vunpack.c.l.b16 %v360
        %v901 = vunpack.c.l.b16 %v370
        %v902 = vunpack.c.l.b16 %v384
        %v903 = vunpack.c.l.b16 %v394
        %v904 = vunpack.c.l.b16 %v408
        %v905 = vunpack.c.l.b16 %v418
        %v906 = vunpack.c.l.b16 %v432
        %v907 = vunpack.c.l.b16 %v442
        %v908 = vunpack.c.l.b16 %v456
        %v909 = vunpack.c.l.b16 %v466
        %v910 = vunpack.c.l.b16 %v480
        %v911 = vunpack.c.l.b16 %v490
        %v912 = vunpack.c.l.b16 %v504
        %v913 = vunpack.c.l.b16 %v514
        %v914 = vunpack.c.l.b16 %v528
        %v915 = vunpack.c.l.b16 %v538
        %v916 = vunpack.c.l.b16 %v552
        %v917 = vunpack.c.l.b16 %v562
        %v918 = vunpack.c.l.b16 %v576
        %v919 = vunpack.c.l.b16 %v586
        %v920 = vunpack.c.l.b16 %v600
        %v921 = vunpack.c.l.b16 %v610
        %v922 = vpack.c.b16 %v891, %v890
        %v923 = vpack.c.b16 %v893, %v892
        %v924 = vpack.c.b16 %v895, %v894
        %v925 = vpack.c.b16 %v897, %v896
        %v926 = vpack.c.b16 %v899, %v898
        %v927 = vpack.c.b16 %v901, %v900
        %v928 = vpack.c.b16 %v903, %v902
        %v929 = vpack.c.b16 %v905, %v904
        %v930 = vpack.c.b16 %v907, %v906
        %v931 = vpack.c.b16 %v909, %v908
        %v932 = vpack.c.b16 %v911, %v910
        %v933 = vpack.c.b16 %v913, %v912
        %v934 = vpack.c.b16 %v915, %v914
        %v935 = vpack.c.b16 %v917, %v916
        %v936 = vpack.c.b16 %v919, %v918
        %v937 = vpack.c.b16 %v921, %v920
        %938 = vrot.lane.b32.xlu0 %v922, 4
        %v939 = vpop.permute.xlu0 %938
        %940 = vrot.lane.b32.xlu0 %v923, 4
        %v941 = vpop.permute.xlu0 %940
        %942 = vrot.lane.b32.xlu0 %v924, 4
        %v943 = vpop.permute.xlu0 %942
        %944 = vrot.lane.b32.xlu0 %v925, 4
        %v945 = vpop.permute.xlu0 %944
        %946 = vrot.lane.b32.xlu0 %v926, 4
        %v947 = vpop.permute.xlu0 %946
        %948 = vrot.lane.b32.xlu0 %v927, 4
        %v949 = vpop.permute.xlu0 %948
        %950 = vrot.lane.b32.xlu0 %v928, 4
        %v951 = vpop.permute.xlu0 %950
        %952 = vrot.lane.b32.xlu0 %v929, 4
        %v953 = vpop.permute.xlu0 %952
        %954 = vrot.lane.b32.xlu0 %v930, 4
        %v955 = vpop.permute.xlu0 %954
        %956 = vrot.lane.b32.xlu0 %v931, 4
        %v957 = vpop.permute.xlu0 %956
        %958 = vrot.lane.b32.xlu0 %v932, 4
        %v959 = vpop.permute.xlu0 %958
        %960 = vrot.lane.b32.xlu0 %v933, 4
        %v961 = vpop.permute.xlu0 %960
        %962 = vrot.lane.b32.xlu0 %v934, 4
        %v963 = vpop.permute.xlu0 %962
        %964 = vrot.lane.b32.xlu0 %v935, 4
        %v965 = vpop.permute.xlu0 %964
        %966 = vrot.lane.b32.xlu0 %v936, 4
        %v967 = vpop.permute.xlu0 %966
        %968 = vrot.lane.b32.xlu0 %v937, 4
        %v969 = vpop.permute.xlu0 %968
        %v970 = vunpack.c.l.b16 %v665
        %v971 = vunpack.c.l.b16 %v668
        %v972 = vunpack.c.l.b16 %v672
        %v973 = vunpack.c.l.b16 %v675
        %v974 = vunpack.c.l.b16 %v679
        %v975 = vunpack.c.l.b16 %v682
        %v976 = vunpack.c.l.b16 %v686
        %v977 = vunpack.c.l.b16 %v689
        %v978 = vunpack.c.l.b16 %v693
        %v979 = vunpack.c.l.b16 %v696
        %v980 = vunpack.c.l.b16 %v700
        %v981 = vunpack.c.l.b16 %v703
        %v982 = vunpack.c.l.b16 %v707
        %v983 = vunpack.c.l.b16 %v710
        %v984 = vunpack.c.l.b16 %v714
        %v985 = vunpack.c.l.b16 %v717
        %v986 = vunpack.c.l.b16 %v721
        %v987 = vunpack.c.l.b16 %v724
        %v988 = vunpack.c.l.b16 %v728
        %v989 = vunpack.c.l.b16 %v731
        %v990 = vunpack.c.l.b16 %v735
        %v991 = vunpack.c.l.b16 %v738
        %v992 = vunpack.c.l.b16 %v742
        %v993 = vunpack.c.l.b16 %v745
        %v994 = vunpack.c.l.b16 %v749
        %v995 = vunpack.c.l.b16 %v752
        %v996 = vunpack.c.l.b16 %v756
        %v997 = vunpack.c.l.b16 %v759
        %v998 = vunpack.c.l.b16 %v763
        %v999 = vunpack.c.l.b16 %v766
        %v1000 = vunpack.c.l.b16 %v770
        %v1001 = vunpack.c.l.b16 %v773
        %v1002 = vpack.c.b16 %v971, %v970
        %v1003 = vpack.c.b16 %v973, %v972
        %v1004 = vpack.c.b16 %v975, %v974
        %v1005 = vpack.c.b16 %v977, %v976
        %v1006 = vpack.c.b16 %v979, %v978
        %v1007 = vpack.c.b16 %v981, %v980
        %v1008 = vpack.c.b16 %v983, %v982
        %v1009 = vpack.c.b16 %v985, %v984
        %v1010 = vpack.c.b16 %v987, %v986
        %v1011 = vpack.c.b16 %v989, %v988
        %v1012 = vpack.c.b16 %v991, %v990
        %v1013 = vpack.c.b16 %v993, %v992
        %v1014 = vpack.c.b16 %v995, %v994
        %v1015 = vpack.c.b16 %v997, %v996
        %v1016 = vpack.c.b16 %v999, %v998
        %v1017 = vpack.c.b16 %v1001, %v1000
        %1018 = vrot.lane.b32.xlu0 %v1002, 8
        %v1019 = vpop.permute.xlu0 %1018
        %1020 = vrot.lane.b32.xlu0 %v1003, 8
        %v1021 = vpop.permute.xlu0 %1020
        %1022 = vrot.lane.b32.xlu0 %v1004, 8
        %v1023 = vpop.permute.xlu0 %1022
        %1024 = vrot.lane.b32.xlu0 %v1005, 8
        %v1025 = vpop.permute.xlu0 %1024
        %1026 = vrot.lane.b32.xlu0 %v1006, 8
        %v1027 = vpop.permute.xlu0 %1026
        %1028 = vrot.lane.b32.xlu0 %v1007, 8
        %v1029 = vpop.permute.xlu0 %1028
        %1030 = vrot.lane.b32.xlu0 %v1008, 8
        %v1031 = vpop.permute.xlu0 %1030
        %1032 = vrot.lane.b32.xlu0 %v1009, 8
        %v1033 = vpop.permute.xlu0 %1032
        %1034 = vrot.lane.b32.xlu0 %v1010, 8
        %v1035 = vpop.permute.xlu0 %1034
        %1036 = vrot.lane.b32.xlu0 %v1011, 8
        %v1037 = vpop.permute.xlu0 %1036
        %1038 = vrot.lane.b32.xlu0 %v1012, 8
        %v1039 = vpop.permute.xlu0 %1038
        %1040 = vrot.lane.b32.xlu0 %v1013, 8
        %v1041 = vpop.permute.xlu0 %1040
        %1042 = vrot.lane.b32.xlu0 %v1014, 8
        %v1043 = vpop.permute.xlu0 %1042
        %1044 = vrot.lane.b32.xlu0 %v1015, 8
        %v1045 = vpop.permute.xlu0 %1044
        %1046 = vrot.lane.b32.xlu0 %v1016, 8
        %v1047 = vpop.permute.xlu0 %1046
        %1048 = vrot.lane.b32.xlu0 %v1017, 8
        %v1049 = vpop.permute.xlu0 %1048
        %v1050 = vunpack.c.l.b16 %v218
        %v1051 = vunpack.c.l.b16 %v219
        %v1052 = vpack.c.b16 %v1051, %v1050
        %1053 = vrot.lane.b32.xlu0 %v875, 12
        %v1054 = vpop.permute.xlu0 %1053
        %1055 = vrot.lane.b32.xlu0 %v876, 12
        %v1056 = vpop.permute.xlu0 %1055
        %1057 = vrot.lane.b32.xlu0 %v877, 12
        %v1058 = vpop.permute.xlu0 %1057
        %1059 = vrot.lane.b32.xlu0 %v878, 12
        %v1060 = vpop.permute.xlu0 %1059
        %1061 = vrot.lane.b32.xlu0 %v879, 12
        %v1062 = vpop.permute.xlu0 %1061
        %1063 = vrot.lane.b32.xlu0 %v880, 12
        %v1064 = vpop.permute.xlu0 %1063
        %1065 = vrot.lane.b32.xlu0 %v881, 12
        %v1066 = vpop.permute.xlu0 %1065
        %1067 = vrot.lane.b32.xlu0 %v882, 12
        %v1068 = vpop.permute.xlu0 %1067
        %1069 = vrot.lane.b32.xlu0 %v883, 12
        %v1070 = vpop.permute.xlu0 %1069
        %1071 = vrot.lane.b32.xlu0 %v884, 12
        %v1072 = vpop.permute.xlu0 %1071
        %1073 = vrot.lane.b32.xlu0 %v885, 12
        %v1074 = vpop.permute.xlu0 %1073
        %1075 = vrot.lane.b32.xlu0 %v886, 12
        %v1076 = vpop.permute.xlu0 %1075
        %1077 = vrot.lane.b32.xlu0 %v887, 12
        %v1078 = vpop.permute.xlu0 %1077
        %1079 = vrot.lane.b32.xlu0 %v888, 12
        %v1080 = vpop.permute.xlu0 %1079
        %1081 = vrot.lane.b32.xlu0 %v889, 12
        %v1082 = vpop.permute.xlu0 %1081
        %1083 = vrot.lane.b32.xlu0 %v1052, 12
        %v1084 = vpop.permute.xlu0 %1083
        %v1085 = vunpack.c.l.b16 %v787
        %v1086 = vunpack.c.l.b16 %v797
        %v1087 = vpack.c.b16 %v1086, %v1085
        %1088 = vrot.lane.b32.xlu0 %v923, 16
        %v1089 = vpop.permute.xlu0 %1088
        %1090 = vrot.lane.b32.xlu0 %v924, 16
        %v1091 = vpop.permute.xlu0 %1090
        %1092 = vrot.lane.b32.xlu0 %v925, 16
        %v1093 = vpop.permute.xlu0 %1092
        %1094 = vrot.lane.b32.xlu0 %v926, 16
        %v1095 = vpop.permute.xlu0 %1094
        %1096 = vrot.lane.b32.xlu0 %v927, 16
        %v1097 = vpop.permute.xlu0 %1096
        %1098 = vrot.lane.b32.xlu0 %v928, 16
        %v1099 = vpop.permute.xlu0 %1098
        %1100 = vrot.lane.b32.xlu0 %v929, 16
        %v1101 = vpop.permute.xlu0 %1100
        %1102 = vrot.lane.b32.xlu0 %v930, 16
        %v1103 = vpop.permute.xlu0 %1102
        %1104 = vrot.lane.b32.xlu0 %v931, 16
        %v1105 = vpop.permute.xlu0 %1104
        %1106 = vrot.lane.b32.xlu0 %v932, 16
        %v1107 = vpop.permute.xlu0 %1106
        %1108 = vrot.lane.b32.xlu0 %v933, 16
        %v1109 = vpop.permute.xlu0 %1108
        %1110 = vrot.lane.b32.xlu0 %v934, 16
        %v1111 = vpop.permute.xlu0 %1110
        %1112 = vrot.lane.b32.xlu0 %v935, 16
        %v1113 = vpop.permute.xlu0 %1112
        %1114 = vrot.lane.b32.xlu0 %v936, 16
        %v1115 = vpop.permute.xlu0 %1114
        %1116 = vrot.lane.b32.xlu0 %v937, 16
        %v1117 = vpop.permute.xlu0 %1116
        %1118 = vrot.lane.b32.xlu0 %v1087, 16
        %v1119 = vpop.permute.xlu0 %1118
        %v1120 = vunpack.c.l.b16 %v804
        %v1121 = vunpack.c.l.b16 %v807
        %v1122 = vpack.c.b16 %v1121, %v1120
        %1123 = vrot.lane.b32.xlu0 %v1003, 20
        %v1124 = vpop.permute.xlu0 %1123
        %1125 = vrot.lane.b32.xlu0 %v1004, 20
        %v1126 = vpop.permute.xlu0 %1125
        %1127 = vrot.lane.b32.xlu0 %v1005, 20
        %v1128 = vpop.permute.xlu0 %1127
        %1129 = vrot.lane.b32.xlu0 %v1006, 20
        %v1130 = vpop.permute.xlu0 %1129
        %1131 = vrot.lane.b32.xlu0 %v1007, 20
        %v1132 = vpop.permute.xlu0 %1131
        %1133 = vrot.lane.b32.xlu0 %v1008, 20
        %v1134 = vpop.permute.xlu0 %1133
        %1135 = vrot.lane.b32.xlu0 %v1009, 20
        %v1136 = vpop.permute.xlu0 %1135
        %1137 = vrot.lane.b32.xlu0 %v1010, 20
        %v1138 = vpop.permute.xlu0 %1137
        %1139 = vrot.lane.b32.xlu0 %v1011, 20
        %v1140 = vpop.permute.xlu0 %1139
        %1141 = vrot.lane.b32.xlu0 %v1012, 20
        %v1142 = vpop.permute.xlu0 %1141
        %1143 = vrot.lane.b32.xlu0 %v1013, 20
        %v1144 = vpop.permute.xlu0 %1143
        %1145 = vrot.lane.b32.xlu0 %v1014, 20
        %v1146 = vpop.permute.xlu0 %1145
        %1147 = vrot.lane.b32.xlu0 %v1015, 20
        %v1148 = vpop.permute.xlu0 %1147
        %1149 = vrot.lane.b32.xlu0 %v1016, 20
        %v1150 = vpop.permute.xlu0 %1149
        %1151 = vrot.lane.b32.xlu0 %v1017, 20
        %v1152 = vpop.permute.xlu0 %1151
        %1153 = vrot.lane.b32.xlu0 %v1122, 20
        %v1154 = vpop.permute.xlu0 %1153
        %v1155 = vunpack.c.l.b16 %v221
        %v1156 = vunpack.c.l.b16 %v222
        %v1157 = vpack.c.b16 %v1156, %v1155
        %1158 = vrot.lane.b32.xlu0 %v876, 24
        %v1159 = vpop.permute.xlu0 %1158
        %1160 = vrot.lane.b32.xlu0 %v877, 24
        %v1161 = vpop.permute.xlu0 %1160
        %1162 = vrot.lane.b32.xlu0 %v878, 24
        %v1163 = vpop.permute.xlu0 %1162
        %1164 = vrot.lane.b32.xlu0 %v879, 24
        %v1165 = vpop.permute.xlu0 %1164
        %1166 = vrot.lane.b32.xlu0 %v880, 24
        %v1167 = vpop.permute.xlu0 %1166
        %1168 = vrot.lane.b32.xlu0 %v881, 24
        %v1169 = vpop.permute.xlu0 %1168
        %1170 = vrot.lane.b32.xlu0 %v882, 24
        %v1171 = vpop.permute.xlu0 %1170
        %1172 = vrot.lane.b32.xlu0 %v883, 24
        %v1173 = vpop.permute.xlu0 %1172
        %1174 = vrot.lane.b32.xlu0 %v884, 24
        %v1175 = vpop.permute.xlu0 %1174
        %1176 = vrot.lane.b32.xlu0 %v885, 24
        %v1177 = vpop.permute.xlu0 %1176
        %1178 = vrot.lane.b32.xlu0 %v886, 24
        %v1179 = vpop.permute.xlu0 %1178
        %1180 = vrot.lane.b32.xlu0 %v887, 24
        %v1181 = vpop.permute.xlu0 %1180
        %1182 = vrot.lane.b32.xlu0 %v888, 24
        %v1183 = vpop.permute.xlu0 %1182
        %1184 = vrot.lane.b32.xlu0 %v889, 24
        %v1185 = vpop.permute.xlu0 %1184
        %1186 = vrot.lane.b32.xlu0 %v1052, 24
        %v1187 = vpop.permute.xlu0 %1186
        %1188 = vrot.lane.b32.xlu0 %v1157, 24
        %v1189 = vpop.permute.xlu0 %1188
        %v1190 = vunpack.c.l.b16 %v821
        %v1191 = vunpack.c.l.b16 %v831
        %v1192 = vpack.c.b16 %v1191, %v1190
        %1193 = vrot.lane.b32.xlu0 %v924, 28
        %v1194 = vpop.permute.xlu0 %1193
        %1195 = vrot.lane.b32.xlu0 %v925, 28
        %v1196 = vpop.permute.xlu0 %1195
        %1197 = vrot.lane.b32.xlu0 %v926, 28
        %v1198 = vpop.permute.xlu0 %1197
        %1199 = vrot.lane.b32.xlu0 %v927, 28
        %v1200 = vpop.permute.xlu0 %1199
        %1201 = vrot.lane.b32.xlu0 %v928, 28
        %v1202 = vpop.permute.xlu0 %1201
        %1203 = vrot.lane.b32.xlu0 %v929, 28
        %v1204 = vpop.permute.xlu0 %1203
        %1205 = vrot.lane.b32.xlu0 %v930, 28
        %v1206 = vpop.permute.xlu0 %1205
        %1207 = vrot.lane.b32.xlu0 %v931, 28
        %v1208 = vpop.permute.xlu0 %1207
        %1209 = vrot.lane.b32.xlu0 %v932, 28
        %v1210 = vpop.permute.xlu0 %1209
        %1211 = vrot.lane.b32.xlu0 %v933, 28
        %v1212 = vpop.permute.xlu0 %1211
        %1213 = vrot.lane.b32.xlu0 %v934, 28
        %v1214 = vpop.permute.xlu0 %1213
        %1215 = vrot.lane.b32.xlu0 %v935, 28
        %v1216 = vpop.permute.xlu0 %1215
        %1217 = vrot.lane.b32.xlu0 %v936, 28
        %v1218 = vpop.permute.xlu0 %1217
        %1219 = vrot.lane.b32.xlu0 %v937, 28
        %v1220 = vpop.permute.xlu0 %1219
        %1221 = vrot.lane.b32.xlu0 %v1087, 28
        %v1222 = vpop.permute.xlu0 %1221
        %1223 = vrot.lane.b32.xlu0 %v1192, 28
        %v1224 = vpop.permute.xlu0 %1223
        %v1225 = vunpack.c.l.b16 %v838
        %v1226 = vunpack.c.l.b16 %v841
        %v1227 = vpack.c.b16 %v1226, %v1225
        %1228 = vrot.lane.b32.xlu0 %v1004, 32
        %v1229 = vpop.permute.xlu0 %1228
        %1230 = vrot.lane.b32.xlu0 %v1005, 32
        %v1231 = vpop.permute.xlu0 %1230
        %1232 = vrot.lane.b32.xlu0 %v1006, 32
        %v1233 = vpop.permute.xlu0 %1232
        %1234 = vrot.lane.b32.xlu0 %v1007, 32
        %v1235 = vpop.permute.xlu0 %1234
        %1236 = vrot.lane.b32.xlu0 %v1008, 32
        %v1237 = vpop.permute.xlu0 %1236
        %1238 = vrot.lane.b32.xlu0 %v1009, 32
        %v1239 = vpop.permute.xlu0 %1238
        %1240 = vrot.lane.b32.xlu0 %v1010, 32
        %v1241 = vpop.permute.xlu0 %1240
        %1242 = vrot.lane.b32.xlu0 %v1011, 32
        %v1243 = vpop.permute.xlu0 %1242
        %1244 = vrot.lane.b32.xlu0 %v1012, 32
        %v1245 = vpop.permute.xlu0 %1244
        %1246 = vrot.lane.b32.xlu0 %v1013, 32
        %v1247 = vpop.permute.xlu0 %1246
        %1248 = vrot.lane.b32.xlu0 %v1014, 32
        %v1249 = vpop.permute.xlu0 %1248
        %1250 = vrot.lane.b32.xlu0 %v1015, 32
        %v1251 = vpop.permute.xlu0 %1250
        %1252 = vrot.lane.b32.xlu0 %v1016, 32
        %v1253 = vpop.permute.xlu0 %1252
        %1254 = vrot.lane.b32.xlu0 %v1017, 32
        %v1255 = vpop.permute.xlu0 %1254
        %1256 = vrot.lane.b32.xlu0 %v1122, 32
        %v1257 = vpop.permute.xlu0 %1256
        %1258 = vrot.lane.b32.xlu0 %v1227, 32
        %v1259 = vpop.permute.xlu0 %1258
        %vm1260 = vcmask 31744
        %v1263 = vsel %vm1260, %v874, %v939
        %v1266 = vsel %vm1260, %v875, %v941
        %v1269 = vsel %vm1260, %v876, %v943
        %v1272 = vsel %vm1260, %v877, %v945
        %v1275 = vsel %vm1260, %v878, %v947
        %v1278 = vsel %vm1260, %v879, %v949
        %v1281 = vsel %vm1260, %v880, %v951
        %v1284 = vsel %vm1260, %v881, %v953
        %v1287 = vsel %vm1260, %v882, %v955
        %v1290 = vsel %vm1260, %v883, %v957
        %v1293 = vsel %vm1260, %v884, %v959
        %v1296 = vsel %vm1260, %v885, %v961
        %v1299 = vsel %vm1260, %v886, %v963
        %v1302 = vsel %vm1260, %v887, %v965
        %v1305 = vsel %vm1260, %v888, %v967
        %v1308 = vsel %vm1260, %v889, %v969
        %vm1309 = vcmask 64512
        %v1311 = vsel %vm1309, %v1263, %v1019
        %v1313 = vsel %vm1309, %v1266, %v1021
        %v1315 = vsel %vm1309, %v1269, %v1023
        %v1317 = vsel %vm1309, %v1272, %v1025
        %v1319 = vsel %vm1309, %v1275, %v1027
        %v1321 = vsel %vm1309, %v1278, %v1029
        %v1323 = vsel %vm1309, %v1281, %v1031
        %v1325 = vsel %vm1309, %v1284, %v1033
        %v1327 = vsel %vm1309, %v1287, %v1035
        %v1329 = vsel %vm1309, %v1290, %v1037
        %v1331 = vsel %vm1309, %v1293, %v1039
        %v1333 = vsel %vm1309, %v1296, %v1041
        %v1335 = vsel %vm1309, %v1299, %v1043
        %v1337 = vsel %vm1309, %v1302, %v1045
        %v1339 = vsel %vm1309, %v1305, %v1047
        %v1341 = vsel %vm1309, %v1308, %v1049
        %vm1342 = vcmask 97280
        %v1344 = vsel %vm1342, %v1311, %v1054
        %v1346 = vsel %vm1342, %v1313, %v1056
        %v1348 = vsel %vm1342, %v1315, %v1058
        %v1350 = vsel %vm1342, %v1317, %v1060
        %v1352 = vsel %vm1342, %v1319, %v1062
        %v1354 = vsel %vm1342, %v1321, %v1064
        %v1356 = vsel %vm1342, %v1323, %v1066
        %v1358 = vsel %vm1342, %v1325, %v1068
        %v1360 = vsel %vm1342, %v1327, %v1070
        %v1362 = vsel %vm1342, %v1329, %v1072
        %v1364 = vsel %vm1342, %v1331, %v1074
        %v1366 = vsel %vm1342, %v1333, %v1076
        %v1368 = vsel %vm1342, %v1335, %v1078
        %v1370 = vsel %vm1342, %v1337, %v1080
        %v1372 = vsel %vm1342, %v1339, %v1082
        %v1374 = vsel %vm1342, %v1341, %v1084
        %vm1375 = vcmask 130048
        %v1377 = vsel %vm1375, %v1344, %v1089
        %v1379 = vsel %vm1375, %v1346, %v1091
        %v1381 = vsel %vm1375, %v1348, %v1093
        %v1383 = vsel %vm1375, %v1350, %v1095
        %v1385 = vsel %vm1375, %v1352, %v1097
        %v1387 = vsel %vm1375, %v1354, %v1099
        %v1389 = vsel %vm1375, %v1356, %v1101
        %v1391 = vsel %vm1375, %v1358, %v1103
        %v1393 = vsel %vm1375, %v1360, %v1105
        %v1395 = vsel %vm1375, %v1362, %v1107
        %v1397 = vsel %vm1375, %v1364, %v1109
        %v1399 = vsel %vm1375, %v1366, %v1111
        %v1401 = vsel %vm1375, %v1368, %v1113
        %v1403 = vsel %vm1375, %v1370, %v1115
        %v1405 = vsel %vm1375, %v1372, %v1117
        %v1407 = vsel %vm1375, %v1374, %v1119
        %vm1408 = vcmask 162816
        %v1410 = vsel %vm1408, %v1377, %v1124
        %v1412 = vsel %vm1408, %v1379, %v1126
        %v1414 = vsel %vm1408, %v1381, %v1128
        %v1416 = vsel %vm1408, %v1383, %v1130
        %v1418 = vsel %vm1408, %v1385, %v1132
        %v1420 = vsel %vm1408, %v1387, %v1134
        %v1422 = vsel %vm1408, %v1389, %v1136
        %v1424 = vsel %vm1408, %v1391, %v1138
        %v1426 = vsel %vm1408, %v1393, %v1140
        %v1428 = vsel %vm1408, %v1395, %v1142
        %v1430 = vsel %vm1408, %v1397, %v1144
        %v1432 = vsel %vm1408, %v1399, %v1146
        %v1434 = vsel %vm1408, %v1401, %v1148
        %v1436 = vsel %vm1408, %v1403, %v1150
        %v1438 = vsel %vm1408, %v1405, %v1152
        %v1440 = vsel %vm1408, %v1407, %v1154
        %vm1441 = vcmask 195584
        %v1443 = vsel %vm1441, %v1410, %v1159
        %v1445 = vsel %vm1441, %v1412, %v1161
        %v1447 = vsel %vm1441, %v1414, %v1163
        %v1449 = vsel %vm1441, %v1416, %v1165
        %v1451 = vsel %vm1441, %v1418, %v1167
        %v1453 = vsel %vm1441, %v1420, %v1169
        %v1455 = vsel %vm1441, %v1422, %v1171
        %v1457 = vsel %vm1441, %v1424, %v1173
        %v1459 = vsel %vm1441, %v1426, %v1175
        %v1461 = vsel %vm1441, %v1428, %v1177
        %v1463 = vsel %vm1441, %v1430, %v1179
        %v1465 = vsel %vm1441, %v1432, %v1181
        %v1467 = vsel %vm1441, %v1434, %v1183
        %v1469 = vsel %vm1441, %v1436, %v1185
        %v1471 = vsel %vm1441, %v1438, %v1187
        %v1473 = vsel %vm1441, %v1440, %v1189
        %vm1474 = vcmask 228352
        %v1476 = vsel %vm1474, %v1443, %v1194
        %v1478 = vsel %vm1474, %v1445, %v1196
        %v1480 = vsel %vm1474, %v1447, %v1198
        %v1482 = vsel %vm1474, %v1449, %v1200
        %v1484 = vsel %vm1474, %v1451, %v1202
        %v1486 = vsel %vm1474, %v1453, %v1204
        %v1488 = vsel %vm1474, %v1455, %v1206
        %v1490 = vsel %vm1474, %v1457, %v1208
        %v1492 = vsel %vm1474, %v1459, %v1210
        %v1494 = vsel %vm1474, %v1461, %v1212
        %v1496 = vsel %vm1474, %v1463, %v1214
        %v1498 = vsel %vm1474, %v1465, %v1216
        %v1500 = vsel %vm1474, %v1467, %v1218
        %v1502 = vsel %vm1474, %v1469, %v1220
        %v1504 = vsel %vm1474, %v1471, %v1222
        %v1506 = vsel %vm1474, %v1473, %v1224
        %vm1507 = vcmask 261120
        %v1509 = vsel %vm1507, %v1476, %v1229
        %v1511 = vsel %vm1507, %v1478, %v1231
        %v1513 = vsel %vm1507, %v1480, %v1233
        %v1515 = vsel %vm1507, %v1482, %v1235
        %v1517 = vsel %vm1507, %v1484, %v1237
        %v1519 = vsel %vm1507, %v1486, %v1239
        %v1521 = vsel %vm1507, %v1488, %v1241
        %v1523 = vsel %vm1507, %v1490, %v1243
        %v1525 = vsel %vm1507, %v1492, %v1245
        %v1527 = vsel %vm1507, %v1494, %v1247
        %v1529 = vsel %vm1507, %v1496, %v1249
        %v1531 = vsel %vm1507, %v1498, %v1251
        %v1533 = vsel %vm1507, %v1500, %v1253
        %v1535 = vsel %vm1507, %v1502, %v1255
        %v1537 = vsel %vm1507, %v1504, %v1257
        %v1539 = vsel %vm1507, %v1506, %v1259
        %v1540 = vld [vmem:[%s1] sm:$0xf]
        %v1541 = vld [vmem:[%s1 + $0x4] sm:$0xf]
        %v1542 = vld [vmem:[%s1 + $0x8] sm:$0xf]
        %v1543 = vld [vmem:[%s1 + $0xc] sm:$0xf]
        %v1544 = vld [vmem:[%s1 + $0x10] sm:$0x3]
        %v1545 = vld [vmem:[%s2] sm:$0x1]
        %v1547 = vperm.slane %v1545, 0
        %v1554 = vunpack.c.l.b16 %v1540
        %v1555 = vunpack.c.l.b16 %v1541
        %v1556 = vunpack.c.l.b16 %v1542
        %v1557 = vunpack.c.l.b16 %v1543
        %v1558 = vunpack.c.l.b16 %v1544
        %v1559 = vpack.c.b16 %v1555, %v1554
        %v1560 = vpack.c.b16 %v1557, %v1556
        %v1561 = vpack.c.b16 %v1558, %v1558
        %vm1564 = vcmask 293888
        %v1565 = vsel %vm1564, %v1509, 0
        %v1567 = vsel %vm1564, %v1511, 0
        %v1569 = vsel %vm1564, %v1513, 0
        %v1571 = vsel %vm1564, %v1515, 0
        %v1573 = vsel %vm1564, %v1517, 0
        %v1575 = vsel %vm1564, %v1519, 0
        %v1577 = vsel %vm1564, %v1521, 0
        %v1579 = vsel %vm1564, %v1523, 0
        %v1581 = vsel %vm1564, %v1525, 0
        %v1583 = vsel %vm1564, %v1527, 0
        %v1585 = vsel %vm1564, %v1529, 0
        %v1587 = vsel %vm1564, %v1531, 0
        %v1589 = vsel %vm1564, %v1533, 0
        %v1591 = vsel %vm1564, %v1535, 0
        %v1593 = vsel %vm1564, %v1537, 0
        %v1595 = vsel %vm1564, %v1539, 0
        %vm1597 = vcmask 1041408
        %v1599 = vsel %vm1597, %v1561, 0
        %1601 = vmatpush.bf16.msra.mxu0 0
        %1602 = vmatpush.bf16.msra.mxu0 0
        %1603 = vmatpush.bf16.msra.mxu0 0
        %1604 = vmatpush.bf16.msra.mxu0 0
        %1605 = vmatpush.bf16.msra.mxu0 0
        %1606 = vmatpush.bf16.msra.mxu0 %v1599
        %1607 = vmatpush.bf16.msra.mxu0 %v1560
        %1608 = vmatpush.bf16.msra.mxu0 %v1559
        %1609 = vmatmul.bf16.gmra.mxu0 %v1565
        %v1610 = vpop.f32.mrf.mxu0
        %v1611 = vadd.f32 %v1547, %v1610
        %v1612 = vpop.f32.mrf.mxu0
        %v1613 = vadd.f32 %v1547, %v1612
        %1614 = vmatmul.bf16.gmra.mxu0 %v1567
        %v1615 = vpop.f32.mrf.mxu0
        %v1616 = vadd.f32 %v1547, %v1615
        %v1617 = vpop.f32.mrf.mxu0
        %v1618 = vadd.f32 %v1547, %v1617
        %1619 = vmatmul.bf16.gmra.mxu0 %v1569
        %v1620 = vpop.f32.mrf.mxu0
        %v1621 = vadd.f32 %v1547, %v1620
        %v1622 = vpop.f32.mrf.mxu0
        %v1623 = vadd.f32 %v1547, %v1622
        %1624 = vmatmul.bf16.gmra.mxu0 %v1571
        %v1625 = vpop.f32.mrf.mxu0
        %v1626 = vadd.f32 %v1547, %v1625
        %v1627 = vpop.f32.mrf.mxu0
        %v1628 = vadd.f32 %v1547, %v1627
        %1629 = vmatmul.bf16.gmra.mxu0 %v1573
        %v1630 = vpop.f32.mrf.mxu0
        %v1631 = vadd.f32 %v1547, %v1630
        %v1632 = vpop.f32.mrf.mxu0
        %v1633 = vadd.f32 %v1547, %v1632
        %1634 = vmatmul.bf16.gmra.mxu0 %v1575
        %v1635 = vpop.f32.mrf.mxu0
        %v1636 = vadd.f32 %v1547, %v1635
        %v1637 = vpop.f32.mrf.mxu0
        %v1638 = vadd.f32 %v1547, %v1637
        %1639 = vmatmul.bf16.gmra.mxu0 %v1577
        %v1640 = vpop.f32.mrf.mxu0
        %v1641 = vadd.f32 %v1547, %v1640
        %v1642 = vpop.f32.mrf.mxu0
        %v1643 = vadd.f32 %v1547, %v1642
        %1644 = vmatmul.bf16.gmra.mxu0 %v1579
        %v1645 = vpop.f32.mrf.mxu0
        %v1646 = vadd.f32 %v1547, %v1645
        %v1647 = vpop.f32.mrf.mxu0
        %v1648 = vadd.f32 %v1547, %v1647
        %1649 = vmatmul.bf16.gmra.mxu0 %v1581
        %v1650 = vpop.f32.mrf.mxu0
        %v1651 = vadd.f32 %v1547, %v1650
        %v1652 = vpop.f32.mrf.mxu0
        %v1653 = vadd.f32 %v1547, %v1652
        %1654 = vmatmul.bf16.gmra.mxu0 %v1583
        %v1655 = vpop.f32.mrf.mxu0
        %v1656 = vadd.f32 %v1547, %v1655
        %v1657 = vpop.f32.mrf.mxu0
        %v1658 = vadd.f32 %v1547, %v1657
        %1659 = vmatmul.bf16.gmra.mxu0 %v1585
        %v1660 = vpop.f32.mrf.mxu0
        %v1661 = vadd.f32 %v1547, %v1660
        %v1662 = vpop.f32.mrf.mxu0
        %v1663 = vadd.f32 %v1547, %v1662
        %1664 = vmatmul.bf16.gmra.mxu0 %v1587
        %v1665 = vpop.f32.mrf.mxu0
        %v1666 = vadd.f32 %v1547, %v1665
        %v1667 = vpop.f32.mrf.mxu0
        %v1668 = vadd.f32 %v1547, %v1667
        %1669 = vmatmul.bf16.gmra.mxu0 %v1589
        %v1670 = vpop.f32.mrf.mxu0
        %v1671 = vadd.f32 %v1547, %v1670
        %v1672 = vpop.f32.mrf.mxu0
        %v1673 = vadd.f32 %v1547, %v1672
        %1674 = vmatmul.bf16.gmra.mxu0 %v1591
        %v1675 = vpop.f32.mrf.mxu0
        %v1676 = vadd.f32 %v1547, %v1675
        %v1677 = vpop.f32.mrf.mxu0
        %v1678 = vadd.f32 %v1547, %v1677
        %1679 = vmatmul.bf16.gmra.mxu0 %v1593
        %v1680 = vpop.f32.mrf.mxu0
        %v1681 = vadd.f32 %v1547, %v1680
        %v1682 = vpop.f32.mrf.mxu0
        %v1683 = vadd.f32 %v1547, %v1682
        %1684 = vmatmul.bf16.gmra.mxu0 %v1595
        %v1685 = vpop.f32.mrf.mxu0
        %v1686 = vadd.f32 %v1547, %v1685
        %v1687 = vpop.f32.mrf.mxu0
        %v1688 = vadd.f32 %v1547, %v1687
        %1689 = vdwg.mxu0
        %v1690 = vmax.f32 %v1611, 0.0
        %v1691 = vmax.f32 %v1613, 0.0
        %v1692 = vmax.f32 %v1616, 0.0
        %v1693 = vmax.f32 %v1618, 0.0
        %v1694 = vmax.f32 %v1621, 0.0
        %v1695 = vmax.f32 %v1623, 0.0
        %v1696 = vmax.f32 %v1626, 0.0
        %v1697 = vmax.f32 %v1628, 0.0
        %v1698 = vmax.f32 %v1631, 0.0
        %v1699 = vmax.f32 %v1633, 0.0
        %v1700 = vmax.f32 %v1636, 0.0
        %v1701 = vmax.f32 %v1638, 0.0
        %v1702 = vmax.f32 %v1641, 0.0
        %v1703 = vmax.f32 %v1643, 0.0
        %v1704 = vmax.f32 %v1646, 0.0
        %v1705 = vmax.f32 %v1648, 0.0
        %v1706 = vmax.f32 %v1651, 0.0
        %v1707 = vmax.f32 %v1653, 0.0
        %v1708 = vmax.f32 %v1656, 0.0
        %v1709 = vmax.f32 %v1658, 0.0
        %v1710 = vmax.f32 %v1661, 0.0
        %v1711 = vmax.f32 %v1663, 0.0
        %v1712 = vmax.f32 %v1666, 0.0
        %v1713 = vmax.f32 %v1668, 0.0
        %v1714 = vmax.f32 %v1671, 0.0
        %v1715 = vmax.f32 %v1673, 0.0
        %v1716 = vmax.f32 %v1676, 0.0
        %v1717 = vmax.f32 %v1678, 0.0
        %v1718 = vmax.f32 %v1681, 0.0
        %v1719 = vmax.f32 %v1683, 0.0
        %v1720 = vmax.f32 %v1686, 0.0
        %v1721 = vmax.f32 %v1688, 0.0
        %v1722 = vpack.c.bf16 %v1690, %v1690
        %v1723 = vpack.c.bf16 %v1691, %v1691
        %v1724 = vpack.c.bf16 %v1692, %v1692
        %v1725 = vpack.c.bf16 %v1693, %v1693
        %v1726 = vpack.c.bf16 %v1694, %v1694
        %v1727 = vpack.c.bf16 %v1695, %v1695
        %v1728 = vpack.c.bf16 %v1696, %v1696
        %v1729 = vpack.c.bf16 %v1697, %v1697
        %v1730 = vpack.c.bf16 %v1698, %v1698
        %v1731 = vpack.c.bf16 %v1699, %v1699
        %v1732 = vpack.c.bf16 %v1700, %v1700
        %v1733 = vpack.c.bf16 %v1701, %v1701
        %v1734 = vpack.c.bf16 %v1702, %v1702
        %v1735 = vpack.c.bf16 %v1703, %v1703
        %v1736 = vpack.c.bf16 %v1704, %v1704
        %v1737 = vpack.c.bf16 %v1705, %v1705
        %v1738 = vpack.c.bf16 %v1706, %v1706
        %v1739 = vpack.c.bf16 %v1707, %v1707
        %v1740 = vpack.c.bf16 %v1708, %v1708
        %v1741 = vpack.c.bf16 %v1709, %v1709
        %v1742 = vpack.c.bf16 %v1710, %v1710
        %v1743 = vpack.c.bf16 %v1711, %v1711
        %v1744 = vpack.c.bf16 %v1712, %v1712
        %v1745 = vpack.c.bf16 %v1713, %v1713
        %v1746 = vpack.c.bf16 %v1714, %v1714
        %v1747 = vpack.c.bf16 %v1715, %v1715
        %v1748 = vpack.c.bf16 %v1716, %v1716
        %v1749 = vpack.c.bf16 %v1717, %v1717
        %v1750 = vpack.c.bf16 %v1718, %v1718
        %v1751 = vpack.c.bf16 %v1719, %v1719
        %v1752 = vpack.c.bf16 %v1720, %v1720
        %v1753 = vpack.c.bf16 %v1721, %v1721
        %vm1754 = vcmask 257024
        %1755 = vst.msk [vmem:[%s163] sm:$0xf] %vm1754, %v1722
        %1756 = vst.msk [vmem:[%s163 + $0x4] sm:$0xf] %vm1754, %v1723
        %1757 = vst.msk [vmem:[%s163 + $0x8] sm:$0xf] %vm1754, %v1724
        %1758 = vst.msk [vmem:[%s163 + $0xc] sm:$0xf] %vm1754, %v1725
        %1759 = vst.msk [vmem:[%s163 + $0x10] sm:$0xf] %vm1754, %v1726
        %1760 = vst.msk [vmem:[%s163 + $0x14] sm:$0xf] %vm1754, %v1727
        %1761 = vst.msk [vmem:[%s163 + $0x18] sm:$0xf] %vm1754, %v1728
        %1762 = vst.msk [vmem:[%s163 + $0x1c] sm:$0xf] %vm1754, %v1729
        %1763 = vst.msk [vmem:[%s163 + $0x20] sm:$0xf] %vm1754, %v1730
        %1764 = vst.msk [vmem:[%s163 + $0x24] sm:$0xf] %vm1754, %v1731
        %1765 = vst.msk [vmem:[%s163 + $0x28] sm:$0xf] %vm1754, %v1732
        %1766 = vst.msk [vmem:[%s163 + $0x2c] sm:$0xf] %vm1754, %v1733
        %1767 = vst.msk [vmem:[%s163 + $0x30] sm:$0xf] %vm1754, %v1734
        %1768 = vst.msk [vmem:[%s163 + $0x34] sm:$0xf] %vm1754, %v1735
        %1769 = vst.msk [vmem:[%s163 + $0x38] sm:$0xf] %vm1754, %v1736
        %1770 = vst.msk [vmem:[%s163 + $0x3c] sm:$0xf] %vm1754, %v1737
        %1771 = vst.msk [vmem:[%s163 + $0x40] sm:$0xf] %vm1754, %v1738
        %1772 = vst.msk [vmem:[%s163 + $0x44] sm:$0xf] %vm1754, %v1739
        %1773 = vst.msk [vmem:[%s163 + $0x48] sm:$0xf] %vm1754, %v1740
        %1774 = vst.msk [vmem:[%s163 + $0x4c] sm:$0xf] %vm1754, %v1741
        %1775 = vst.msk [vmem:[%s163 + $0x50] sm:$0xf] %vm1754, %v1742
        %1776 = vst.msk [vmem:[%s163 + $0x54] sm:$0xf] %vm1754, %v1743
        %1777 = vst.msk [vmem:[%s163 + $0x58] sm:$0xf] %vm1754, %v1744
        %1778 = vst.msk [vmem:[%s163 + $0x5c] sm:$0xf] %vm1754, %v1745
        %1779 = vst.msk [vmem:[%s163 + $0x60] sm:$0xf] %vm1754, %v1746
        %1780 = vst.msk [vmem:[%s163 + $0x64] sm:$0xf] %vm1754, %v1747
        %1781 = vst.msk [vmem:[%s163 + $0x68] sm:$0xf] %vm1754, %v1748
        %1782 = vst.msk [vmem:[%s163 + $0x6c] sm:$0xf] %vm1754, %v1749
        %1783 = vst.msk [vmem:[%s163 + $0x70] sm:$0xf] %vm1754, %v1750
        %1784 = vst.msk [vmem:[%s163 + $0x74] sm:$0xf] %vm1754, %v1751
        %1785 = vst.msk [vmem:[%s163 + $0x78] sm:$0xf] %vm1754, %v1752
        %1786 = vst.msk [vmem:[%s163 + $0x7c] sm:$0xf] %vm1754, %v1753
        %s1787 = sand.u32 %s93, 1
        %s1788 = scalar_lea.sflag [#allocation3], %s1787
        %s1789 = sand.u32 %s93, 1
        %s1790 = smul.addr %s1789, 128
        %s1791 = scalar_lea.vmem [#allocation2], %s1790
        // Predicated region
        $region33: #{tpu_custom_call.1} parent=31 // pred_check
          %p1792 = pneg %p103
        $region34: #{tpu_custom_call.1} parent=31 // pred_check_branch
          %1794 = sbr.rel (%p1792) target = $region36
        $region35: #{tpu_custom_call.1} parent=31 // pred_region
          %1796 = vsyncadd %s1788, 0
          %s1797 = smul.addr %s17, 32
          %s1798 = smul.addr %s1797, 4
          %s1799 = scalar_lea.hbm %s3, %s1798
          %s1800 = sshll.u32 %s1791, 4
          %s1801 = int_to_ptr.vmem [resolvable:$true] %s1800
          %s1802 = sshll.u32 %s1799, 4
          %s1803 = int_to_ptr.hbm [resolvable:$true] %s1802
          %1808 = dma.vmem_to_hbm [thread:$0]  %s1801, 2048, %s1803, %s1788, 64, 64, 4
        $region36: #{tpu_custom_call.1} parent=31 // pred_fallthru
          _
      $region32: #{tpu_custom_call.1} parent=5 // pred_fallthru
        _
      %p1809 = scmp.le.s32.totalorder 2, %s12
      // Predicated region
      $region37: #{tpu_custom_call.1} parent=5 // pred_check
        %p1810 = pneg %p1809
      $region38: #{tpu_custom_call.1} parent=5 // pred_check_branch
        %1812 = sbr.rel (%p1810) target = $region40
      $region39: #{tpu_custom_call.1} parent=5 // pred_region
        %s1813 = ssub.s32 %s12, 2
        // Predicated region
        $region41: #{tpu_custom_call.1} parent=39 // pred_check
          %p1814 = pneg %p109
        $region42: #{tpu_custom_call.1} parent=39 // pred_check_branch
          %1816 = sbr.rel (%p1814) target = $region44
        $region43: #{tpu_custom_call.1} parent=39 // pred_region
          %s1817 = sand.u32 %s94, 1
          %s1818 = scalar_lea.sflag [#allocation3], %s1817
          %s1819 = sand.u32 %s94, 1
          %s1820 = smul.addr %s1819, 128
          %s1821 = scalar_lea.vmem [#allocation2], %s1820
          %1823 = dma.done %s1818, 2048
        $region44: #{tpu_custom_call.1} parent=39 // pred_fallthru
          _
      $region40: #{tpu_custom_call.1} parent=5 // pred_fallthru
        _
    $region6: #{tpu_custom_call.1} parent=1 // loop_footer
      %s16 = sadd.s32 1, %s12
    $region7: #{tpu_custom_call.1} parent=1 // loop_footer_branch
      %11 = sbr.rel target = $region3
    $region8: #{tpu_custom_call.1} parent=1 // loop_exit
      _
    %1824 = vsyncpa [#allocation3], 1
    %s1825 = scalar_lea.sflag [#allocation3], 1
    %1826 = vsyncpa %s1825, 1

</llo_original>
